<compile_context>
chip_gen: v5e
topology: v5e:2x2
jax: 0.10.0
libtpu: 0.0.40
codegen_flags: <defaults>
</compile_context>

<pallas_src>
import functools

import jax
import jax.numpy as jnp
from jax.experimental import pallas as pl
from jax.experimental.pallas import tpu as pltpu


def _round_up(x, m):
    return (x + m - 1) // m * m


def _pick_tile(dim, max_tile, granule):
    """Return (tile, padded_dim): padded_dim = round_up(dim, granule), tile =
    largest multiple of `granule` <= max_tile that divides padded_dim."""
    padded = _round_up(dim, granule)
    t = min(max_tile, padded)
    t -= t % granule
    while padded % t != 0:
        t -= granule
    return t, padded


# ----------------------------------------------------------------------------
# Pallas kernel 1: tiled bf16 matmul with f32 accumulator (MXU hot path)
#   - optional fused A prologue: a = relu(a * scale_k + shift_k)   (prev BN)
#   - optional fused epilogue:   per-block column sum / sum-of-squares
# ----------------------------------------------------------------------------
def _mm_kernel(*refs, has_scale, has_stats, mask_rows, tm):
    if has_scale:
        a_ref, b_ref, sc_ref, sh_ref = refs[:4]
        rest = refs[4:]
    else:
        a_ref, b_ref = refs[:2]
        rest = refs[2:]
    if has_stats:
        o_ref, cs_ref, cq_ref, acc_ref = rest
    else:
        o_ref, acc_ref = rest

    @pl.when(pl.program_id(2) == 0)
    def _():
        acc_ref[...] = jnp.zeros_like(acc_ref)

    a = a_ref[...]
    if has_scale:
        a = a.astype(jnp.float32) * sc_ref[...] + sh_ref[...]
        a = jnp.maximum(a, 0.0)
        if mask_rows is not None:
            # Keep ragged/padded A rows exactly zero (otherwise relu(shift)
            # would leak into the output tail and the column statistics).
            rows = (jax.lax.broadcasted_iota(jnp.int32, a.shape, 0)
                    + pl.program_id(0) * tm)
            a = jnp.where(rows < mask_rows, a, 0.0)
        a = a.astype(jnp.bfloat16)

    acc_ref[...] += jnp.dot(a, b_ref[...], preferred_element_type=jnp.float32)

    # Store (and emit BN partial statistics) only on the last K step.
    @pl.when(pl.program_id(2) == pl.num_programs(2) - 1)
    def _():
        acc = acc_ref[...]
        o_ref[...] = acc.astype(o_ref.dtype)
        if has_stats:
            cs_ref[...] = jnp.sum(acc, axis=0, keepdims=True)[None]
            cq_ref[...] = jnp.sum(acc * acc, axis=0, keepdims=True)[None]


def pallas_matmul(a, b, *, a_scale=None, a_shift=None, compute_stats=False,
                  tm=256, tk=1024, tn=512, out_dtype=jnp.bfloat16):
    """(M, K) @ (Kb, N) -> padded (Mp, Np), bf16 operands, f32 accumulation.

    a_scale / a_shift: optional per-K-column affine (+ReLU) applied to A
    before the dot (fused BN of the producing layer).
    compute_stats: also return per-column (sum, sumsq) of the f32 output
    (BN statistics of this layer), reduced over the tiny per-block partials.
    """
    M, K = a.shape
    Kb, N = b.shape
    tm_e, Mp = _pick_tile(M, tm, 8)
    tk_e, Kp = _pick_tile(max(K, Kb), tk, 128)
    tn_e, Np = _pick_tile(N, tn, 128)

    # Megacore heuristic: if there is only one M block, try to expose >= 2
    # N blocks so the ("parallel","parallel") axes give the 2nd TC work (v7x).
    if Mp <= tm_e and Np // tn_e < 2 and Np >= 256:
        tn_e = Np // 2
        tn_e -= tn_e % 128
        while Np % tn_e != 0:
            tn_e -= 128

    a = a.astype(jnp.bfloat16)
    if (Mp, Kp) != (M, K):
        # Only triggers for the tiny stem-K (147->256) / ragged-M tails;
        # weights are packed pre-padded so B below is never padded per call.
        a = jnp.pad(a, ((0, Mp - M), (0, Kp - K)))
    b = b.astype(jnp.bfloat16)
    if (Kp, Np) != (Kb, N):
        b = jnp.pad(b, ((0, Kp - Kb), (0, Np - N)))

    has_scale = a_scale is not None
    ins = [a, b]
    in_specs = [pl.BlockSpec((tm_e, tk_e), lambda i, j, k: (i, k)),
                pl.BlockSpec((tk_e, tn_e), lambda i, j, k: (k, j))]
    if has_scale:
        sc = a_scale.reshape(1, -1).astype(jnp.float32)
        sh = a_shift.reshape(1, -1).astype(jnp.float32)
        if sc.shape[1] != Kp:
            sc = jnp.pad(sc, ((0, 0), (0, Kp - sc.shape[1])))
            sh = jnp.pad(sh, ((0, 0), (0, Kp - sh.shape[1])))
        ins += [sc, sh]
        in_specs += [pl.BlockSpec((1, tk_e), lambda i, j, k: (0, k)),
                     pl.BlockSpec((1, tk_e), lambda i, j, k: (0, k))]

    gi = Mp // tm_e
    if compute_stats:
        out_shape = (jax.ShapeDtypeStruct((Mp, Np), out_dtype),
                     jax.ShapeDtypeStruct((gi, 1, Np), jnp.float32),
                     jax.ShapeDtypeStruct((gi, 1, Np), jnp.float32))
        out_specs = (pl.BlockSpec((tm_e, tn_e), lambda i, j, k: (i, j)),
                     pl.BlockSpec((1, 1, tn_e), lambda i, j, k: (i, 0, j)),
                     pl.BlockSpec((1, 1, tn_e), lambda i, j, k: (i, 0, j)))
    else:
        out_shape = jax.ShapeDtypeStruct((Mp, Np), out_dtype)
        out_specs = pl.BlockSpec((tm_e, tn_e), lambda i, j, k: (i, j))

    mask_rows = M if (has_scale and Mp != M) else None
    kernel = functools.partial(_mm_kernel, has_scale=has_scale,
                               has_stats=compute_stats,
                               mask_rows=mask_rows, tm=tm_e)

    res = pl.pallas_call(
        kernel,
        out_shape=out_shape,
        grid_spec=pltpu.PrefetchScalarGridSpec(
            num_scalar_prefetch=0,
            grid=(Mp // tm_e, Np // tn_e, Kp // tk_e),
            in_specs=in_specs,
            out_specs=out_specs,
            scratch_shapes=[pltpu.VMEM((tm_e, tn_e), jnp.float32)]),
        compiler_params=pltpu.CompilerParams(
            dimension_semantics=("parallel", "parallel", "arbitrary")),
    )(*ins)

    if compute_stats:
        y, ps, pq = res
        return y, ps.sum(axis=(0, 1)), pq.sum(axis=(0, 1))
    return res


# ----------------------------------------------------------------------------
# Pallas kernel 2: fused affine (BN) + optional residual (+ its BN) + ReLU
# ----------------------------------------------------------------------------
def _affine_kernel(x_ref, s_ref, b_ref, o_ref, *, relu):
    y = x_ref[...].astype(jnp.float32) * s_ref[...] + b_ref[...]
    if relu:
        y = jnp.maximum(y, 0.0)
    o_ref[...] = y.astype(o_ref.dtype)


def _affine_res_kernel(x_ref, r_ref, s_ref, b_ref, o_ref, *, relu):
    y = (x_ref[...].astype(jnp.float32) * s_ref[...] + b_ref[...]
         + r_ref[...].astype(jnp.float32))
    if relu:
        y = jnp.maximum(y, 0.0)
    o_ref[...] = y.astype(o_ref.dtype)


def _affine_res2_kernel(x_ref, r_ref, s_ref, b_ref, rs_ref, rb_ref, o_ref, *,
                        relu):
    y = (x_ref[...].astype(jnp.float32) * s_ref[...] + b_ref[...]
         + r_ref[...].astype(jnp.float32) * rs_ref[...] + rb_ref[...])
    if relu:
        y = jnp.maximum(y, 0.0)
    o_ref[...] = y.astype(o_ref.dtype)


def _row_tile(M, C):
    # target ~1 MiB bf16 blocks (review: 1-2 MiB hits ~85% of HBM roofline).
    target = min(4096, max(256, (1 << 20) // (C * 2)))
    return _pick_tile(M, target, 8)


def bn_act(y_nhwc, scale, shift, residual=None, res_scale=None, res_shift=None,
           relu=True, out_dtype=jnp.bfloat16):
    """out = y*scale+shift (+ residual[*res_scale+res_shift]) (+ ReLU)."""
    n, h, w, c = y_nhwc.shape
    m = n * h * w
    x2 = y_nhwc.reshape(m, c)
    tr, mp = _row_tile(m, c)
    if mp != m:
        x2 = jnp.pad(x2, ((0, mp - m), (0, 0)))

    sp = scale.reshape(1, c).astype(jnp.float32)
    bp = shift.reshape(1, c).astype(jnp.float32)
    row_spec = pl.BlockSpec((tr, c), lambda i: (i, 0))
    vec_spec = pl.BlockSpec((1, c), lambda i: (0, 0))
    out_shape = jax.ShapeDtypeStruct((mp, c), out_dtype)
    cparams = pltpu.CompilerParams(dimension_semantics=("parallel",))

    if residual is None:
        out = pl.pallas_call(
            functools.partial(_affine_kernel, relu=relu),
            out_shape=out_shape,
            grid_spec=pltpu.PrefetchScalarGridSpec(
                num_scalar_prefetch=0, grid=(mp // tr,),
                in_specs=[row_spec, vec_spec, vec_spec],
                out_specs=row_spec),
            compiler_params=cparams,
        )(x2, sp, bp)
    else:
        r2 = residual.reshape(m, c)
        if mp != m:
            r2 = jnp.pad(r2, ((0, mp - m), (0, 0)))
        if res_scale is None:
            out = pl.pallas_call(
                functools.partial(_affine_res_kernel, relu=relu),
                out_shape=out_shape,
                grid_spec=pltpu.PrefetchScalarGridSpec(
                    num_scalar_prefetch=0, grid=(mp // tr,),
                    in_specs=[row_spec, row_spec, vec_spec, vec_spec],
                    out_specs=row_spec),
                compiler_params=cparams,
            )(x2, r2, sp, bp)
        else:
            rsp = res_scale.reshape(1, c).astype(jnp.float32)
            rbp = res_shift.reshape(1, c).astype(jnp.float32)
            out = pl.pallas_call(
                functools.partial(_affine_res2_kernel, relu=relu),
                out_shape=out_shape,
                grid_spec=pltpu.PrefetchScalarGridSpec(
                    num_scalar_prefetch=0, grid=(mp // tr,),
                    in_specs=[row_spec, row_spec, vec_spec, vec_spec,
                              vec_spec, vec_spec],
                    out_specs=row_spec),
                compiler_params=cparams,
            )(x2, r2, sp, bp, rsp, rbp)
    if mp != m:
        out = out[:m]
    return out.reshape(n, h, w, c)


# ----------------------------------------------------------------------------
# Conv / BN / pooling building blocks (glue in plain JAX, compute in Pallas)
# ----------------------------------------------------------------------------
def _extract_patches(x, kh, kw, stride, pad):
    """x: NHWC -> (N*OH*OW, kh*kw*C) im2col matrix (bf16)."""
    n, h, w, c = x.shape
    if pad:
        x = jnp.pad(x, ((0, 0), (pad, pad), (pad, pad), (0, 0)))
    oh = (h + 2 * pad - kh) // stride + 1
    ow = (w + 2 * pad - kw) // stride + 1
    cols = []
    for i in range(kh):
        for j in range(kw):
            cols.append(x[:, i:i + stride * (oh - 1) + 1:stride,
                          j:j + stride * (ow - 1) + 1:stride, :])
    patches = jnp.concatenate(cols, axis=-1)          # (N, OH, OW, kh*kw*C)
    return patches.reshape(n * oh * ow, kh * kw * c), oh, ow


def conv2d(x, wp, stride=1, pad=0, a_scale=None, a_shift=None,
           compute_stats=True):
    """x: NHWC bf16 (channel dim 128-padded for internal layers);
    wp: packed weight dict {'kh','kw','mat': (Kp, CoutP) bf16}.
    Returns (y_nhwc, (colsum, colsumsq, m)) for the following BatchNorm."""
    kh, kw = wp['kh'], wp['kw']
    n, h, w_, c = x.shape
    if kh == 1 and kw == 1 and pad == 0:
        xs = x[:, ::stride, ::stride, :] if stride > 1 else x
        _, oh, ow, _ = xs.shape
        a = xs.reshape(n * oh * ow, c)
    else:
        # TODO(synk): 3x3/7x7 convs still materialize bf16 im2col patches in
        # HBM; an implicit-GEMM (tap axis in K grid, shifted windows) pending.
        a, oh, ow = _extract_patches(x, kh, kw, stride, pad)

    res = pallas_matmul(a, wp['mat'], a_scale=a_scale, a_shift=a_shift,
                        compute_stats=compute_stats, out_dtype=jnp.bfloat16)
    if compute_stats:
        y, s, q = res
    else:
        y, s, q = res, None, None
    m = n * oh * ow
    if y.shape[0] != m:
        y = y[:m]
    y = y.reshape(n, oh, ow, wp['mat'].shape[1])
    if compute_stats:
        return y, (s, q, m)
    return y


def bn_scale_shift(stats, bn, eps=1e-5):
    """Training-mode BatchNorm2d: fold batch statistics into scale/shift."""
    s, q, m = stats
    mean = s / m
    # NOTE: E[x^2]-E[x]^2 in f32 from the f32 GEMM accumulator; clamped.
    var = jnp.maximum(q / m - mean * mean, 0.0)
    scale = bn['gamma'] * jax.lax.rsqrt(var + eps)
    shift = bn['beta'] - mean * scale
    return scale, shift


def maxpool_3x3_s2_p1(x):
    # TODO(synk): 3x3/s2 maxpool kept in plain JAX (9 shifted slices + max);
    # negligible vs. the conv GEMMs.
    n, h, w, c = x.shape
    xp = jnp.pad(x, ((0, 0), (1, 1), (1, 1), (0, 0)),
                 constant_values=-jnp.inf)
    oh = (h + 2 - 3) // 2 + 1
    ow = (w + 2 - 3) // 2 + 1
    out = None
    for i in range(3):
        for j in range(3):
            patch = xp[:, i:i + 2 * (oh - 1) + 1:2, j:j + 2 * (ow - 1) + 1:2, :]
            out = patch if out is None else jnp.maximum(out, patch)
    return out


# ----------------------------------------------------------------------------
# ResNet-50 parameter construction (deterministic, synthetic) + weight packing
# ----------------------------------------------------------------------------
_BOTTLENECK_CFG = [(64, 3, 1), (128, 4, 2), (256, 6, 2), (512, 3, 2)]
_EXPANSION = 4


class _KeyGen:
    def __init__(self, key):
        self.key = key

    def next(self):
        self.key, sub = jax.random.split(self.key)
        return sub


def _conv_w(kg, kh, kw, cin, cout):
    return jax.random.normal(kg.next(), (kh, kw, cin, cout), jnp.float32) * 0.05


def _pack_conv(w, pad_cin=True):
    """Pack a (kh,kw,cin,cout) weight into a zero-padded (Kp, CoutP) bf16 GEMM
    matrix, done once at init (no per-forward weight copies)."""
    kh, kw, cin, cout = w.shape
    cin_p = _round_up(cin, 128) if pad_cin else cin
    cout_p = _round_up(cout, 128)
    wp = jnp.zeros((kh, kw, cin_p, cout_p), jnp.float32)
    wp = wp.at[:, :, :cin, :cout].set(w)
    kdim = kh * kw * cin_p
    kdim_p = _round_up(kdim, 128)
    mat = jnp.zeros((kdim_p, cout_p), jnp.bfloat16)
    mat = mat.at[:kdim, :].set(wp.reshape(kdim, cout_p).astype(jnp.bfloat16))
    return {'kh': kh, 'kw': kw, 'mat': mat}


def _bn_p(c_real, c_pad):
    # gamma zeroed on padded channels -> padded lanes can never be amplified.
    gamma = jnp.concatenate([jnp.ones((c_real,), jnp.float32),
                             jnp.zeros((c_pad - c_real,), jnp.float32)])
    return {'gamma': gamma, 'beta': jnp.zeros((c_pad,), jnp.float32)}


def init_resnet50(key, num_classes=1000):
    kg = _KeyGen(key)
    params = {
        'conv1': _pack_conv(_conv_w(kg, 7, 7, 3, 64), pad_cin=False),
        'bn1': _bn_p(64, _round_up(64, 128)),
    }
    inplanes = 64
    layers = []
    for planes, blocks, stride in _BOTTLENECK_CFG:
        layer = []
        for b in range(blocks):
            s = stride if b == 0 else 1
            blk = {
                'stride': s,
                'conv1': _pack_conv(_conv_w(kg, 1, 1, inplanes, planes)),
                'bn1': _bn_p(planes, _round_up(planes, 128)),
                'conv2': _pack_conv(_conv_w(kg, 3, 3, planes, planes)),
                'bn2': _bn_p(planes, _round_up(planes, 128)),
                'conv3': _pack_conv(_conv_w(kg, 1, 1, planes,
                                            planes * _EXPANSION)),
                'bn3': _bn_p(planes * _EXPANSION,
                             _round_up(planes * _EXPANSION, 128)),
            }
            if b == 0 and (s != 1 or inplanes != planes * _EXPANSION):
                blk['down_conv'] = _pack_conv(
                    _conv_w(kg, 1, 1, inplanes, planes * _EXPANSION))
                blk['down_bn'] = _bn_p(planes * _EXPANSION,
                                       _round_up(planes * _EXPANSION, 128))
            layer.append(blk)
            inplanes = planes * _EXPANSION
        layers.append(layer)
    params['layers'] = layers

    fc_w = jax.random.normal(kg.next(), (2048, num_classes), jnp.float32) * 0.02
    ncp = _round_up(num_classes, 128)
    params['fc_mat'] = (jnp.zeros((2048, ncp), jnp.bfloat16)
                        .at[:, :num_classes].set(fc_w.astype(jnp.bfloat16)))
    params['fc_b'] = jnp.zeros((num_classes,), jnp.float32)
    params['num_classes'] = num_classes
    return params


# ----------------------------------------------------------------------------
# Forward pass
# ----------------------------------------------------------------------------
def _bottleneck(x, blk):
    s = blk['stride']
    # 1x1 reduce; its BN stats come from the GEMM epilogue.
    y1, st1 = conv2d(x, blk['conv1'])
    sc1, sh1 = bn_scale_shift(st1, blk['bn1'])
    a1 = bn_act(y1, sc1, sh1, relu=True)          # feeds the 3x3 im2col
    # 3x3 (stride on conv2, torchvision v1.5 style)
    y2, st2 = conv2d(a1, blk['conv2'], stride=s, pad=1)
    sc2, sh2 = bn_scale_shift(st2, blk['bn2'])
    # 1x1 expand with bn2+ReLU fused into its A prologue (no standalone pass)
    y3, st3 = conv2d(y2, blk['conv3'], a_scale=sc2, a_shift=sh2)
    sc3, sh3 = bn_scale_shift(st3, blk['bn3'])
    if 'down_conv' in blk:
        yd, std = conv2d(x, blk['down_conv'], stride=s)
        scd, shd = bn_scale_shift(std, blk['down_bn'])
        # bn3 + downsample-bn + residual add + relu in ONE elementwise pass
        return bn_act(y3, sc3, sh3, residual=yd, res_scale=scd, res_shift=shd)
    return bn_act(y3, sc3, sh3, residual=x)


def resnet50_forward(params, x_nchw):
    # NCHW -> NHWC, bf16 activations throughout (f32 math inside kernels).
    x = jnp.transpose(x_nchw, (0, 2, 3, 1)).astype(jnp.bfloat16)
    y0, st0 = conv2d(x, params['conv1'], stride=2, pad=3)
    sc0, sh0 = bn_scale_shift(st0, params['bn1'])
    x = bn_act(y0, sc0, sh0, relu=True)
    x = maxpool_3x3_s2_p1(x)
    for layer in params['layers']:
        for blk in layer:
            x = _bottleneck(x, blk)
    pooled = jnp.mean(x.astype(jnp.float32), axis=(1, 2))     # (N, 2048)
    logits = pallas_matmul(pooled, params['fc_mat'], compute_stats=False,
                           out_dtype=jnp.float32)
    n = x_nchw.shape[0]
    nc = params['num_classes']
    return logits[:n, :nc] + params['fc_b']                    # bias add in JAX


# ----------------------------------------------------------------------------
if __name__ == "__main__":
    key = jax.random.PRNGKey(0)
    pkey, xkey = jax.random.split(key)

    num_classes = 1000
    params = init_resnet50(pkey, num_classes=num_classes)

    # Small input consistent with the module: NCHW, 3 channels.
    x = jax.random.normal(xkey, (2, 3, 32, 32), jnp.float32)

    logits = resnet50_forward(params, x)
    logits = jax.block_until_ready(logits)

    assert logits.shape == (2, num_classes), logits.shape
    assert bool(jnp.all(jnp.isfinite(logits)))
    print("KERNEL_OK")
</pallas_src>

<mosaic_0001>
module attributes {stable_mosaic.version = 11 : i64} {
  func.func @_mm_kernel(%arg0: i32, %arg1: i32, %arg2: i32, %arg3: memref<256x256xbf16, #tpu.memory_space<vmem>>, %arg4: memref<256x128xbf16, #tpu.memory_space<vmem>>, %arg5: memref<256x128xbf16, #tpu.memory_space<vmem>>, %arg6: memref<1x1x128xf32, #tpu.memory_space<vmem>>, %arg7: memref<1x1x128xf32, #tpu.memory_space<vmem>>, %arg8: memref<256x128xf32, #tpu.memory_space<vmem>>) attributes {dimension_semantics = [#tpu.dimension_semantics<parallel>, #tpu.dimension_semantics<parallel>, #tpu.dimension_semantics<arbitrary>], iteration_bounds = array<i64: 2, 1, 1>, scalar_prefetch = 0 : i64, scratch_operands = 1 : i64, tpu.core_type = #tpu.core_type<tc>, window_params = [{transform_indices = @transform_0, window_bounds = array<i64: 256, 256>}, {transform_indices = @transform_1, window_bounds = array<i64: 256, 128>}, {transform_indices = @transform_2, window_bounds = array<i64: 256, 128>}, {transform_indices = @transform_3, window_bounds = array<i64: 1, 1, 128>}, {transform_indices = @transform_4, window_bounds = array<i64: 1, 1, 128>}]} {
    %c0_i32 = arith.constant 0 : i32
    %0 = arith.cmpi eq, %arg2, %c0_i32 : i32
    %1 = arith.extui %0 : i1 to i32
    %c0_i32_0 = arith.constant 0 : i32
    %2 = arith.cmpi ne, %1, %c0_i32_0 : i32
    scf.if %2 {
      %cst_10 = arith.constant 0.000000e+00 : f32
      %12 = vector.broadcast %cst_10 : f32 to vector<256x128xf32>
      %c0_11 = arith.constant 0 : index
      %c0_12 = arith.constant 0 : index
      %13 = vector.load %arg8[%c0_11, %c0_12] : memref<256x128xf32, #tpu.memory_space<vmem>>, vector<256x128xf32>
      tpu.vector_store %arg8[%c0_11, %c0_12], %12 {strides = array<i32>} : memref<256x128xf32, #tpu.memory_space<vmem>>, vector<256x128xf32>,
    } else {
    }
    %c0 = arith.constant 0 : index
    %c0_1 = arith.constant 0 : index
    %3 = vector.load %arg3[%c0, %c0_1] : memref<256x256xbf16, #tpu.memory_space<vmem>>, vector<256x256xbf16>
    %c0_2 = arith.constant 0 : index
    %c0_3 = arith.constant 0 : index
    %4 = vector.load %arg8[%c0_2, %c0_3] : memref<256x128xf32, #tpu.memory_space<vmem>>, vector<256x128xf32>
    %c0_4 = arith.constant 0 : index
    %c0_5 = arith.constant 0 : index
    %5 = vector.load %arg4[%c0_4, %c0_5] : memref<256x128xbf16, #tpu.memory_space<vmem>>, vector<256x128xbf16>
    %cst = arith.constant dense<0.000000e+00> : vector<256x128xf32>
    %6 = tpu.matmul %3, %5, %cst {dimension_numbers = #tpu.dot_dimension_numbers<[1], [0], [0], [1], [0, 0, 1, 1], [], []>} : vector<256x256xbf16>, vector<256x128xbf16>, vector<256x128xf32> -> vector<256x128xf32>
    %7 = arith.addf %4, %6 : vector<256x128xf32>
    %c0_6 = arith.constant 0 : index
    %c0_7 = arith.constant 0 : index
    %8 = vector.load %arg8[%c0_6, %c0_7] : memref<256x128xf32, #tpu.memory_space<vmem>>, vector<256x128xf32>
    tpu.vector_store %arg8[%c0_6, %c0_7], %7 {strides = array<i32>} : memref<256x128xf32, #tpu.memory_space<vmem>>, vector<256x128xf32>,
    %c0_i32_8 = arith.constant 0 : i32
    %9 = arith.cmpi eq, %arg2, %c0_i32_8 : i32
    %10 = arith.extui %9 : i1 to i32
    %c0_i32_9 = arith.constant 0 : i32
    %11 = arith.cmpi ne, %10, %c0_i32_9 : i32
    scf.if %11 {
      %c0_10 = arith.constant 0 : index
      %c0_11 = arith.constant 0 : index
      %12 = vector.load %arg8[%c0_10, %c0_11] : memref<256x128xf32, #tpu.memory_space<vmem>>, vector<256x128xf32>
      %13 = arith.truncf %12 : vector<256x128xf32> to vector<256x128xbf16>
      %c0_12 = arith.constant 0 : index
      %c0_13 = arith.constant 0 : index
      %14 = vector.load %arg5[%c0_12, %c0_13] : memref<256x128xbf16, #tpu.memory_space<vmem>>, vector<256x128xbf16>
      tpu.vector_store %arg5[%c0_12, %c0_13], %13 {strides = array<i32>} : memref<256x128xbf16, #tpu.memory_space<vmem>>, vector<256x128xbf16>,
      %cst_14 = arith.constant dense<0.000000e+00> : vector<128xf32>
      %15 = vector.multi_reduction <add>, %12, %cst_14 [0] : vector<256x128xf32> to vector<128xf32>
      %16 = vector.shape_cast %15 : vector<128xf32> to vector<1x128xf32>
      %17 = vector.shape_cast %16 : vector<1x128xf32> to vector<1x1x128xf32>
      %c0_15 = arith.constant 0 : index
      %c0_16 = arith.constant 0 : index
      %c0_17 = arith.constant 0 : index
      %18 = vector.load %arg6[%c0_15, %c0_16, %c0_17] : memref<1x1x128xf32, #tpu.memory_space<vmem>>, vector<1x1x128xf32>
      tpu.vector_store %arg6[%c0_15, %c0_16, %c0_17], %17 {strides = array<i32>} : memref<1x1x128xf32, #tpu.memory_space<vmem>>, vector<1x1x128xf32>,
      %19 = arith.mulf %12, %12 : vector<256x128xf32>
      %cst_18 = arith.constant dense<0.000000e+00> : vector<128xf32>
      %20 = vector.multi_reduction <add>, %19, %cst_18 [0] : vector<256x128xf32> to vector<128xf32>
      %21 = vector.shape_cast %20 : vector<128xf32> to vector<1x128xf32>
      %22 = vector.shape_cast %21 : vector<1x128xf32> to vector<1x1x128xf32>
      %c0_19 = arith.constant 0 : index
      %c0_20 = arith.constant 0 : index
      %c0_21 = arith.constant 0 : index
      %23 = vector.load %arg7[%c0_19, %c0_20, %c0_21] : memref<1x1x128xf32, #tpu.memory_space<vmem>>, vector<1x1x128xf32>
      tpu.vector_store %arg7[%c0_19, %c0_20, %c0_21], %22 {strides = array<i32>} : memref<1x1x128xf32, #tpu.memory_space<vmem>>, vector<1x1x128xf32>,
    } else {
    }
    return
  }
  func.func @transform_0(%arg0: i32, %arg1: i32, %arg2: i32) -> (i32, i32) {
    %c0_i32 = arith.constant 0 : i32
    return %arg0, %arg2 : i32, i32
  }
  func.func @transform_1(%arg0: i32, %arg1: i32, %arg2: i32) -> (i32, i32) {
    %c0_i32 = arith.constant 0 : i32
    return %arg2, %arg1 : i32, i32
  }
  func.func @transform_2(%arg0: i32, %arg1: i32, %arg2: i32) -> (i32, i32) {
    %c0_i32 = arith.constant 0 : i32
    return %arg0, %arg1 : i32, i32
  }
  func.func @transform_3(%arg0: i32, %arg1: i32, %arg2: i32) -> (i32, i32, i32) {
    %c0_i32 = arith.constant 0 : i32
    %c0_i32_0 = arith.constant 0 : i32
    return %arg0, %c0_i32, %arg1 : i32, i32, i32
  }
  func.func @transform_4(%arg0: i32, %arg1: i32, %arg2: i32) -> (i32, i32, i32) {
    %c0_i32 = arith.constant 0 : i32
    %c0_i32_0 = arith.constant 0 : i32
    return %arg0, %c0_i32, %arg1 : i32, i32, i32
  }
}

</mosaic_0001>

<llo_original>
// kernel: tpu_custom_call.1
$region0: #{tpu_custom_call.1}
  #allocation0 [shape = 'u32[]', space=smem, size = 0x4, offset = 0x4, fixed_abs, tag = 'smem constant byte address 0x4 - core index']
  #allocation1 [shape = 'u32[72,128]{1,0:T(1,128)}', space=vmem, size = 0x9000, scoped, tag = 'internal scratch']
  #allocation2 [shape = 'f32[256,128]{1,0:T(8,128)}', space=vmem, size = 0x20000, scoped, tag = 'scratch operand']
  %s0 = inlined_call_operand.hbm [shape: bf16[512,256], index: 0, kind: input, shape index: {}]
  %s1 = inlined_call_operand.hbm [shape: bf16[256,128], index: 1, kind: input, shape index: {}]
  %s2 = inlined_call_operand.hbm [shape: bf16[512,128], index: 2, kind: output, shape index: {0}]
  %s3 = inlined_call_operand.hbm [shape: f32[2,1,128], index: 3, kind: output, shape index: {1}]
  %s4 = inlined_call_operand.hbm [shape: f32[2,1,128], index: 4, kind: output, shape index: {2}]
  %5 = xla_tuple %s2, %s3, %s4
  %s6 = sld [smem:[#allocation0]]
  $region73: #{tpu_custom_call.1} parent=0
    _
  %s8 = ssub.s32 1, %s6
  %s9 = scalar_select 0, %s8, %s6
  $region1: #{tpu_custom_call.1} parent=0
    #allocation3 [shape = 'u8[262144]{0}', space=vmem, size = 0x40000, scoped, tag = 'input window, operand 0']
    #allocation4 [shape = 's32[2]{0}', space=sflag, size = 0x8, scoped, tag = 'scoped memory for tpu_custom_call.1']
    #allocation5 [shape = 's32[2]{0}', space=sflag, size = 0x8, scoped, tag = 'scoped memory for tpu_custom_call.1']
    #allocation6 [shape = 'u8[65536]{0}', space=vmem, size = 0x10000, scoped, tag = 'input window, operand 1, single buffered']
    #allocation7 [shape = 's32[1]{0}', space=sflag, size = 0x4, scoped, tag = 'scoped memory for tpu_custom_call.1']
    #allocation8 [shape = 'u8[131072]{0}', space=vmem, size = 0x20000, scoped, tag = 'output window, operand 0']
    #allocation9 [shape = 'u8[1024]{0}', space=vmem, size = 0x400, scoped, tag = 'output window, operand 1']
    #allocation10 [shape = 's32[2]{0}', space=sflag, size = 0x8, scoped, tag = 'scoped memory for tpu_custom_call.1']
    #allocation11 [shape = 'u8[1024]{0}', space=vmem, size = 0x400, scoped, tag = 'output window, operand 2']
    %10 = vsyncpa [#allocation4], 0
    %s11 = scalar_lea.sflag [#allocation4], 1
    %12 = vsyncpa %s11, 0
    %13 = vsyncpa [#allocation7], 0
    %14 = vsyncpa [#allocation5], 0
    %s15 = scalar_lea.sflag [#allocation5], 1
    %16 = vsyncpa %s15, 0
    %17 = vsyncpa [#allocation10], 0
    %s18 = scalar_lea.sflag [#allocation10], 1
    %19 = vsyncpa %s18, 0
    loop: start=0, step=1, limit=4
    $region2: #{tpu_custom_call.1} parent=1 // loop_pre_header
      _
    $region3: #{tpu_custom_call.1} parent=1 // loop_header
      %s21 = sphi 0, %s25
      %p22 = scmp.ge.s32.totalorder %s21, 4
      %s28 = sphi 0, %s47
      %s29 = sphi 0, %s43
      %s30 = sphi 0, %s39
      %s31 = sphi 0, %s28
      %s32 = sphi 0, %s29
      %s33 = sphi 0, %s30
      %s34 = sphi 0, %s31
      %s35 = sphi 0, %s32
      %s36 = sphi 0, %s33
      %s52 = sphi 0, %s54
      %s55 = sphi 0, %s52
      %s56 = sphi 0, %s55
      %s72 = sphi 0, %s56
      %s80 = sphi 0, %s82
      %s83 = sphi 0, %s80
      %s84 = sphi 0, %s83
      %s100 = sphi 0, %s84
      %s108 = sphi 0, %s110
      %s111 = sphi 0, %s108
      %s112 = sphi 0, %s111
      %s128 = sphi 0, %s112
      %s136 = sphi 0, %s138
      %s139 = sphi 0, %s136
      %s140 = sphi 0, %s139
      %s156 = sphi 0, %s140
      %s164 = sphi 0, %s166
      %s167 = sphi 0, %s164
      %s168 = sphi 0, %s167
      %s184 = sphi 0, %s168
    $region4: #{tpu_custom_call.1} parent=1 // loop_header_branch
      %24 = sbr.rel (%p22) target = $region8
    $region5: #{tpu_custom_call.1} parent=1 // loop_body
      %s26 = ssub.s32 %s21, 1
      %s27 = ssub.s32 %s21, 2
      %s37 = sadd.s32 1, %s30
      %p38 = scmp.ge.s32.totalorder %s37, 1
      %s39 = scalar_select %p38, 0, %s37
      %s40 = sadd.s32 1, %s29
      %s41 = scalar_select %p38, %s40, %s29
      %p42 = scmp.ge.s32.totalorder %s41, 1
      %s43 = scalar_select %p42, 0, %s41
      %s44 = sadd.s32 1, %s28
      %s45 = scalar_select %p42, %s44, %s28
      %p46 = scmp.ge.s32.totalorder %s45, 2
      %s47 = scalar_select %p46, 0, %s45
      %s48 = ssub.s32 %s28, %s47
      %s49 = ssub.s32 %s30, %s39
      %s50 = sor.u32 %s48, %s49
      %p51 = scmp.eq.s32.totalorder %s50, 0
      %s53 = sadd.s32 %s52, 1
      %s54 = scalar_select %p51, %s52, %s53
      %p57 = pneg %p51
      %p58 = scmp.eq.s32.totalorder %s21, 1
      %p59 = por %p57, %p58
      %p60 = scmp.ne.s32.totalorder %s52, %s55
      %p61 = scmp.eq.s32.totalorder %s21, 0
      %p62 = por %p60, %p61
      %p63 = scmp.ne.s32.totalorder %s52, %s55
      %p64 = scmp.eq.s32.totalorder %s26, 1
      %p65 = por %p63, %p64
      %p66 = scmp.ne.s32.totalorder %s55, %s56
      %p67 = scmp.eq.s32.totalorder %s26, 0
      %p68 = por %p66, %p67
      %p69 = scmp.ne.s32.totalorder %s55, %s56
      %p70 = scmp.eq.s32.totalorder %s27, 1
      %p71 = por %p69, %p70
      %p73 = scmp.ne.s32.totalorder %s56, %s72
      %p74 = scmp.eq.s32.totalorder %s27, 0
      %p75 = por %p73, %p74
      %s76 = ssub.s32 %s30, %s39
      %s77 = ssub.s32 %s29, %s43
      %s78 = sor.u32 %s76, %s77
      %p79 = scmp.eq.s32.totalorder %s78, 0
      %s81 = sadd.s32 %s80, 1
      %s82 = scalar_select %p79, %s80, %s81
      %p85 = pneg %p79
      %p86 = scmp.eq.s32.totalorder %s21, 1
      %p87 = por %p85, %p86
      %p88 = scmp.ne.s32.totalorder %s80, %s83
      %p89 = scmp.eq.s32.totalorder %s21, 0
      %p90 = por %p88, %p89
      %p91 = scmp.ne.s32.totalorder %s80, %s83
      %p92 = scmp.eq.s32.totalorder %s26, 1
      %p93 = por %p91, %p92
      %p94 = scmp.ne.s32.totalorder %s83, %s84
      %p95 = scmp.eq.s32.totalorder %s26, 0
      %p96 = por %p94, %p95
      %p97 = scmp.ne.s32.totalorder %s83, %s84
      %p98 = scmp.eq.s32.totalorder %s27, 1
      %p99 = por %p97, %p98
      %p101 = scmp.ne.s32.totalorder %s84, %s100
      %p102 = scmp.eq.s32.totalorder %s27, 0
      %p103 = por %p101, %p102
      %s104 = ssub.s32 %s28, %s47
      %s105 = ssub.s32 %s29, %s43
      %s106 = sor.u32 %s104, %s105
      %p107 = scmp.eq.s32.totalorder %s106, 0
      %s109 = sadd.s32 %s108, 1
      %s110 = scalar_select %p107, %s108, %s109
      %p113 = pneg %p107
      %p114 = scmp.eq.s32.totalorder %s21, 1
      %p115 = por %p113, %p114
      %p116 = scmp.ne.s32.totalorder %s108, %s111
      %p117 = scmp.eq.s32.totalorder %s21, 0
      %p118 = por %p116, %p117
      %p119 = scmp.ne.s32.totalorder %s108, %s111
      %p120 = scmp.eq.s32.totalorder %s26, 1
      %p121 = por %p119, %p120
      %p122 = scmp.ne.s32.totalorder %s111, %s112
      %p123 = scmp.eq.s32.totalorder %s26, 0
      %p124 = por %p122, %p123
      %p125 = scmp.ne.s32.totalorder %s111, %s112
      %p126 = scmp.eq.s32.totalorder %s27, 1
      %p127 = por %p125, %p126
      %p129 = scmp.ne.s32.totalorder %s112, %s128
      %p130 = scmp.eq.s32.totalorder %s27, 0
      %p131 = por %p129, %p130
      %s132 = ssub.s32 %s28, %s47
      %s133 = ssub.s32 %s29, %s43
      %s134 = sor.u32 %s132, %s133
      %p135 = scmp.eq.s32.totalorder %s134, 0
      %s137 = sadd.s32 %s136, 1
      %s138 = scalar_select %p135, %s136, %s137
      %p141 = pneg %p135
      %p142 = scmp.eq.s32.totalorder %s21, 1
      %p143 = por %p141, %p142
      %p144 = scmp.ne.s32.totalorder %s136, %s139
      %p145 = scmp.eq.s32.totalorder %s21, 0
      %p146 = por %p144, %p145
      %p147 = scmp.ne.s32.totalorder %s136, %s139
      %p148 = scmp.eq.s32.totalorder %s26, 1
      %p149 = por %p147, %p148
      %p150 = scmp.ne.s32.totalorder %s139, %s140
      %p151 = scmp.eq.s32.totalorder %s26, 0
      %p152 = por %p150, %p151
      %p153 = scmp.ne.s32.totalorder %s139, %s140
      %p154 = scmp.eq.s32.totalorder %s27, 1
      %p155 = por %p153, %p154
      %p157 = scmp.ne.s32.totalorder %s140, %s156
      %p158 = scmp.eq.s32.totalorder %s27, 0
      %p159 = por %p157, %p158
      %s160 = ssub.s32 %s28, %s47
      %s161 = ssub.s32 %s29, %s43
      %s162 = sor.u32 %s160, %s161
      %p163 = scmp.eq.s32.totalorder %s162, 0
      %s165 = sadd.s32 %s164, 1
      %s166 = scalar_select %p163, %s164, %s165
      %p169 = pneg %p163
      %p170 = scmp.eq.s32.totalorder %s21, 1
      %p171 = por %p169, %p170
      %p172 = scmp.ne.s32.totalorder %s164, %s167
      %p173 = scmp.eq.s32.totalorder %s21, 0
      %p174 = por %p172, %p173
      %p175 = scmp.ne.s32.totalorder %s164, %s167
      %p176 = scmp.eq.s32.totalorder %s26, 1
      %p177 = por %p175, %p176
      %p178 = scmp.ne.s32.totalorder %s167, %s168
      %p179 = scmp.eq.s32.totalorder %s26, 0
      %p180 = por %p178, %p179
      %p181 = scmp.ne.s32.totalorder %s167, %s168
      %p182 = scmp.eq.s32.totalorder %s27, 1
      %p183 = por %p181, %p182
      %p185 = scmp.ne.s32.totalorder %s168, %s184
      %p186 = scmp.eq.s32.totalorder %s27, 0
      %p187 = por %p185, %p186
      %p188 = scmp.le.s32.totalorder 1, %s21
      %p189 = scmp.lt.s32.totalorder %s21, 3
      %p190 = pnand %p188, %p189
      %p191 = pneg %p190
      // Predicated region
      $region9: #{tpu_custom_call.1} parent=5 // pred_check
        _
      $region10: #{tpu_custom_call.1} parent=5 // pred_check_branch
        %193 = sbr.rel (%p190) target = $region12
      $region11: #{tpu_custom_call.1} parent=5 // pred_region
        %s194 = ssub.s32 %s21, 1
        // Predicated region
        $region13: #{tpu_custom_call.1} parent=11 // pred_check
          %p195 = pneg %p96
        $region14: #{tpu_custom_call.1} parent=11 // pred_check_branch
          %197 = sbr.rel (%p195) target = $region16
        $region15: #{tpu_custom_call.1} parent=11 // pred_region
          %s198 = smul.u32 32, %s33
          %200 = vsyncadd [#allocation7], 0
          %s201 = sadd.s32 %s32, %s198
          %s202 = smul.addr %s201, 4
          %s203 = scalar_lea.hbm %s1, %s202
          %s204 = sshll.u32 %s203, 4
          %s205 = int_to_ptr.hbm [resolvable:$true] %s204
          %s206 = sshll.u32 [#allocation6], 4
          %s207 = int_to_ptr.vmem [resolvable:$true] %s206
          %212 = dma.hbm_to_vmem [thread:$0]  %s205, 2048, %s207, [#allocation7], 64, 64, 4
        $region16: #{tpu_custom_call.1} parent=11 // pred_fallthru
          _
      $region12: #{tpu_custom_call.1} parent=5 // pred_fallthru
        _
      %p213 = scmp.lt.s32.totalorder %s21, 2
      // Predicated region
      $region17: #{tpu_custom_call.1} parent=5 // pred_check
        %p214 = pneg %p213
      $region18: #{tpu_custom_call.1} parent=5 // pred_check_branch
        %216 = sbr.rel (%p214) target = $region20
      $region19: #{tpu_custom_call.1} parent=5 // pred_region
        // Predicated region
        $region21: #{tpu_custom_call.1} parent=19 // pred_check
          %p217 = pneg %p62
        $region22: #{tpu_custom_call.1} parent=19 // pred_check_branch
          %219 = sbr.rel (%p217) target = $region24
        $region23: #{tpu_custom_call.1} parent=19 // pred_region
          %s220 = sand.u32 %s52, 1
          %s221 = scalar_lea.sflag [#allocation4], %s220
          %s222 = sand.u32 %s52, 1
          %s223 = smul.addr %s222, 256
          %s224 = scalar_lea.vmem [#allocation3], %s223
          %s225 = smul.u32 32, %s28
          %s226 = smul.u32 2, %s30
          %228 = vsyncadd %s221, 0
          %s229 = smul.addr %s225, 2
          %s230 = sadd.s32 %s226, %s229
          %s231 = smul.addr %s230, 4
          %s232 = scalar_lea.hbm %s0, %s231
          %s233 = sshll.u32 %s232, 4
          %s234 = int_to_ptr.hbm [resolvable:$true] %s233
          %s235 = sshll.u32 %s224, 4
          %s236 = int_to_ptr.vmem [resolvable:$true] %s235
          %241 = dma.hbm_to_vmem [thread:$0]  %s234, 4096, %s236, %s221, 128, 128, 8
        $region24: #{tpu_custom_call.1} parent=19 // pred_fallthru
          _
      $region20: #{tpu_custom_call.1} parent=5 // pred_fallthru
        _
      %p242 = scmp.le.s32.totalorder 1, %s21
      %p243 = scmp.lt.s32.totalorder %s21, 3
      %p244 = pnand %p242, %p243
      %p245 = pneg %p244
      // Predicated region
      $region25: #{tpu_custom_call.1} parent=5 // pred_check
        _
      $region26: #{tpu_custom_call.1} parent=5 // pred_check_branch
        %247 = sbr.rel (%p244) target = $region28
      $region27: #{tpu_custom_call.1} parent=5 // pred_region
        %s248 = ssub.s32 %s21, 1
        %s249 = sand.u32 %s55, 1
        %s250 = scalar_lea.sflag [#allocation4], %s249
        %s251 = sand.u32 %s55, 1
        %s252 = smul.addr %s251, 256
        %s253 = scalar_lea.vmem [#allocation3], %s252
        // Predicated region
        $region29: #{tpu_custom_call.1} parent=27 // pred_check
          %p254 = pneg %p68
        $region30: #{tpu_custom_call.1} parent=27 // pred_check_branch
          %256 = sbr.rel (%p254) target = $region32
        $region31: #{tpu_custom_call.1} parent=27 // pred_region
          %258 = dma.done %s250, 4096
        $region32: #{tpu_custom_call.1} parent=27 // pred_fallthru
          _
        // Predicated region
        $region33: #{tpu_custom_call.1} parent=27 // pred_check
          %p259 = pneg %p96
        $region34: #{tpu_custom_call.1} parent=27 // pred_check_branch
          %261 = sbr.rel (%p259) target = $region36
        $region35: #{tpu_custom_call.1} parent=27 // pred_region
          %263 = dma.done [#allocation7], 2048
        $region36: #{tpu_custom_call.1} parent=27 // pred_fallthru
          _
        %s264 = sand.u32 %s55, 1
        %s265 = scalar_lea.sflag [#allocation4], %s264
        %s266 = sand.u32 %s55, 1
        %s267 = smul.addr %s266, 256
        %s268 = scalar_lea.vmem [#allocation3], %s267
        %p269 = pneg %p68
        %p270 = pneg %p65
        %p271 = pneg %p96
        %p272 = pneg %p93
        %p273 = pneg %p124
        %p274 = pneg %p121
        %s275 = sand.u32 %s111, 1
        %s276 = scalar_lea.sflag [#allocation5], %s275
        %s277 = sand.u32 %s111, 1
        %s278 = smul.addr %s277, 128
        %s279 = scalar_lea.vmem [#allocation8], %s278
        %p280 = pneg %p152
        %p281 = pneg %p149
        %s282 = sand.u32 %s26, 1
        %s283 = scalar_lea.sflag [#allocation10], %s282
        %s284 = sand.u32 %s139, 1
        %s285 = scalar_lea.vmem [#allocation9], %s284
        %p286 = pneg %p180
        %p287 = pneg %p177
        %s288 = sand.u32 %s26, 1
        %s289 = scalar_lea.sflag [#allocation10], %s288
        %s290 = sand.u32 %s167, 1
        %s291 = scalar_lea.vmem [#allocation11], %s290
        %s292 = smul.u32 32, %s31
        %s293 = smul.u32 2, %s33
        %s294 = smul.u32 32, %s33
        %s295 = smul.u32 32, %s31
        %p296 = scmp.eq.s32.totalorder %s33, 0
        // Predicated region
        $region37: #{tpu_custom_call.1} parent=27 // pred_check
          %p297 = pneg %p296
        $region38: #{tpu_custom_call.1} parent=27 // pred_check_branch
          %299 = sbr.rel (%p297) target = $region40
        $region39: #{tpu_custom_call.1} parent=27 // pred_region
          %300 = vst [vmem:[#allocation2] sm:$0xff] 0.0
          %301 = vst [vmem:[#allocation2 + $0x8] sm:$0xff] 0.0
          %302 = vst [vmem:[#allocation2 + $0x10] sm:$0xff] 0.0
          %303 = vst [vmem:[#allocation2 + $0x18] sm:$0xff] 0.0
          %304 = vst [vmem:[#allocation2 + $0x20] sm:$0xff] 0.0
          %305 = vst [vmem:[#allocation2 + $0x28] sm:$0xff] 0.0
          %306 = vst [vmem:[#allocation2 + $0x30] sm:$0xff] 0.0
          %307 = vst [vmem:[#allocation2 + $0x38] sm:$0xff] 0.0
          %308 = vst [vmem:[#allocation2 + $0x40] sm:$0xff] 0.0
          %309 = vst [vmem:[#allocation2 + $0x48] sm:$0xff] 0.0
          %310 = vst [vmem:[#allocation2 + $0x50] sm:$0xff] 0.0
          %311 = vst [vmem:[#allocation2 + $0x58] sm:$0xff] 0.0
          %312 = vst [vmem:[#allocation2 + $0x60] sm:$0xff] 0.0
          %313 = vst [vmem:[#allocation2 + $0x68] sm:$0xff] 0.0
          %314 = vst [vmem:[#allocation2 + $0x70] sm:$0xff] 0.0
          %315 = vst [vmem:[#allocation2 + $0x78] sm:$0xff] 0.0
          %316 = vst [vmem:[#allocation2 + $0x80] sm:$0xff] 0.0
          %317 = vst [vmem:[#allocation2 + $0x88] sm:$0xff] 0.0
          %318 = vst [vmem:[#allocation2 + $0x90] sm:$0xff] 0.0
          %319 = vst [vmem:[#allocation2 + $0x98] sm:$0xff] 0.0
          %320 = vst [vmem:[#allocation2 + $0xa0] sm:$0xff] 0.0
          %321 = vst [vmem:[#allocation2 + $0xa8] sm:$0xff] 0.0
          %322 = vst [vmem:[#allocation2 + $0xb0] sm:$0xff] 0.0
          %323 = vst [vmem:[#allocation2 + $0xb8] sm:$0xff] 0.0
          %324 = vst [vmem:[#allocation2 + $0xc0] sm:$0xff] 0.0
          %325 = vst [vmem:[#allocation2 + $0xc8] sm:$0xff] 0.0
          %326 = vst [vmem:[#allocation2 + $0xd0] sm:$0xff] 0.0
          %327 = vst [vmem:[#allocation2 + $0xd8] sm:$0xff] 0.0
          %328 = vst [vmem:[#allocation2 + $0xe0] sm:$0xff] 0.0
          %329 = vst [vmem:[#allocation2 + $0xe8] sm:$0xff] 0.0
          %330 = vst [vmem:[#allocation2 + $0xf0] sm:$0xff] 0.0
          %331 = vst [vmem:[#allocation2 + $0xf8] sm:$0xff] 0.0
        $region40: #{tpu_custom_call.1} parent=27 // pred_fallthru
          _
        %v332 = vld [vmem:[%s253] sm:$0xff]
        %v333 = vld [vmem:[%s253 + $0x8] sm:$0xff]
        %v334 = vld [vmem:[%s253 + $0x10] sm:$0xff]
        %v335 = vld [vmem:[%s253 + $0x18] sm:$0xff]
        %v336 = vld [vmem:[%s253 + $0x20] sm:$0xff]
        %v337 = vld [vmem:[%s253 + $0x28] sm:$0xff]
        %v338 = vld [vmem:[%s253 + $0x30] sm:$0xff]
        %v339 = vld [vmem:[%s253 + $0x38] sm:$0xff]
        %v340 = vld [vmem:[%s253 + $0x40] sm:$0xff]
        %v341 = vld [vmem:[%s253 + $0x48] sm:$0xff]
        %v342 = vld [vmem:[%s253 + $0x50] sm:$0xff]
        %v343 = vld [vmem:[%s253 + $0x58] sm:$0xff]
        %v344 = vld [vmem:[%s253 + $0x60] sm:$0xff]
        %v345 = vld [vmem:[%s253 + $0x68] sm:$0xff]
        %v346 = vld [vmem:[%s253 + $0x70] sm:$0xff]
        %v347 = vld [vmem:[%s253 + $0x78] sm:$0xff]
        %v348 = vld [vmem:[%s253 + $0x80] sm:$0xff]
        %v349 = vld [vmem:[%s253 + $0x88] sm:$0xff]
        %v350 = vld [vmem:[%s253 + $0x90] sm:$0xff]
        %v351 = vld [vmem:[%s253 + $0x98] sm:$0xff]
        %v352 = vld [vmem:[%s253 + $0xa0] sm:$0xff]
        %v353 = vld [vmem:[%s253 + $0xa8] sm:$0xff]
        %v354 = vld [vmem:[%s253 + $0xb0] sm:$0xff]
        %v355 = vld [vmem:[%s253 + $0xb8] sm:$0xff]
        %v356 = vld [vmem:[%s253 + $0xc0] sm:$0xff]
        %v357 = vld [vmem:[%s253 + $0xc8] sm:$0xff]
        %v358 = vld [vmem:[%s253 + $0xd0] sm:$0xff]
        %v359 = vld [vmem:[%s253 + $0xd8] sm:$0xff]
        %v360 = vld [vmem:[%s253 + $0xe0] sm:$0xff]
        %v361 = vld [vmem:[%s253 + $0xe8] sm:$0xff]
        %v362 = vld [vmem:[%s253 + $0xf0] sm:$0xff]
        %v363 = vld [vmem:[%s253 + $0xf8] sm:$0xff]
        %v364 = vld [vmem:[#allocation2] sm:$0xff]
        %v365 = vld [vmem:[#allocation2 + $0x8] sm:$0xff]
        %v366 = vld [vmem:[#allocation2 + $0x10] sm:$0xff]
        %v367 = vld [vmem:[#allocation2 + $0x18] sm:$0xff]
        %v368 = vld [vmem:[#allocation2 + $0x20] sm:$0xff]
        %v369 = vld [vmem:[#allocation2 + $0x28] sm:$0xff]
        %v370 = vld [vmem:[#allocation2 + $0x30] sm:$0xff]
        %v371 = vld [vmem:[#allocation2 + $0x38] sm:$0xff]
        %v372 = vld [vmem:[#allocation2 + $0x40] sm:$0xff]
        %v373 = vld [vmem:[#allocation2 + $0x48] sm:$0xff]
        %v374 = vld [vmem:[#allocation2 + $0x50] sm:$0xff]
        %v375 = vld [vmem:[#allocation2 + $0x58] sm:$0xff]
        %v376 = vld [vmem:[#allocation2 + $0x60] sm:$0xff]
        %v377 = vld [vmem:[#allocation2 + $0x68] sm:$0xff]
        %v378 = vld [vmem:[#allocation2 + $0x70] sm:$0xff]
        %v379 = vld [vmem:[#allocation2 + $0x78] sm:$0xff]
        %v380 = vld [vmem:[#allocation2 + $0x80] sm:$0xff]
        %v381 = vld [vmem:[#allocation2 + $0x88] sm:$0xff]
        %v382 = vld [vmem:[#allocation2 + $0x90] sm:$0xff]
        %v383 = vld [vmem:[#allocation2 + $0x98] sm:$0xff]
        %v384 = vld [vmem:[#allocation2 + $0xa0] sm:$0xff]
        %v385 = vld [vmem:[#allocation2 + $0xa8] sm:$0xff]
        %v386 = vld [vmem:[#allocation2 + $0xb0] sm:$0xff]
        %v387 = vld [vmem:[#allocation2 + $0xb8] sm:$0xff]
        %v388 = vld [vmem:[#allocation2 + $0xc0] sm:$0xff]
        %v389 = vld [vmem:[#allocation2 + $0xc8] sm:$0xff]
        %v390 = vld [vmem:[#allocation2 + $0xd0] sm:$0xff]
        %v391 = vld [vmem:[#allocation2 + $0xd8] sm:$0xff]
        %v392 = vld [vmem:[#allocation2 + $0xe0] sm:$0xff]
        %v393 = vld [vmem:[#allocation2 + $0xe8] sm:$0xff]
        %v394 = vld [vmem:[#allocation2 + $0xf0] sm:$0xff]
        %v395 = vld [vmem:[#allocation2 + $0xf8] sm:$0xff]
        %v396 = vld [vmem:[#allocation6] sm:$0xf]
        %v397 = vld [vmem:[#allocation6 + $0x4] sm:$0xf]
        %v398 = vld [vmem:[#allocation6 + $0x8] sm:$0xf]
        %v399 = vld [vmem:[#allocation6 + $0xc] sm:$0xf]
        %v400 = vld [vmem:[#allocation6 + $0x10] sm:$0xf]
        %v401 = vld [vmem:[#allocation6 + $0x14] sm:$0xf]
        %v402 = vld [vmem:[#allocation6 + $0x18] sm:$0xf]
        %v403 = vld [vmem:[#allocation6 + $0x1c] sm:$0xf]
        %v404 = vld [vmem:[#allocation6 + $0x20] sm:$0xf]
        %v405 = vld [vmem:[#allocation6 + $0x24] sm:$0xf]
        %v406 = vld [vmem:[#allocation6 + $0x28] sm:$0xf]
        %v407 = vld [vmem:[#allocation6 + $0x2c] sm:$0xf]
        %v408 = vld [vmem:[#allocation6 + $0x30] sm:$0xf]
        %v409 = vld [vmem:[#allocation6 + $0x34] sm:$0xf]
        %v410 = vld [vmem:[#allocation6 + $0x38] sm:$0xf]
        %v411 = vld [vmem:[#allocation6 + $0x3c] sm:$0xf]
        %v412 = vld [vmem:[#allocation6 + $0x40] sm:$0xf]
        %v413 = vld [vmem:[#allocation6 + $0x44] sm:$0xf]
        %v414 = vld [vmem:[#allocation6 + $0x48] sm:$0xf]
        %v415 = vld [vmem:[#allocation6 + $0x4c] sm:$0xf]
        %v416 = vld [vmem:[#allocation6 + $0x50] sm:$0xf]
        %v417 = vld [vmem:[#allocation6 + $0x54] sm:$0xf]
        %v418 = vld [vmem:[#allocation6 + $0x58] sm:$0xf]
        %v419 = vld [vmem:[#allocation6 + $0x5c] sm:$0xf]
        %v420 = vld [vmem:[#allocation6 + $0x60] sm:$0xf]
        %v421 = vld [vmem:[#allocation6 + $0x64] sm:$0xf]
        %v422 = vld [vmem:[#allocation6 + $0x68] sm:$0xf]
        %v423 = vld [vmem:[#allocation6 + $0x6c] sm:$0xf]
        %v424 = vld [vmem:[#allocation6 + $0x70] sm:$0xf]
        %v425 = vld [vmem:[#allocation6 + $0x74] sm:$0xf]
        %v426 = vld [vmem:[#allocation6 + $0x78] sm:$0xf]
        %v427 = vld [vmem:[#allocation6 + $0x7c] sm:$0xf]
        %v460 = vunpack.c.l.b16 %v332
        %v461 = vunpack.c.h.b16 %v332
        %v462 = vunpack.c.l.b16 %v333
        %v463 = vunpack.c.h.b16 %v333
        %v464 = vunpack.c.l.b16 %v334
        %v465 = vunpack.c.h.b16 %v334
        %v466 = vunpack.c.l.b16 %v335
        %v467 = vunpack.c.h.b16 %v335
        %v468 = vunpack.c.l.b16 %v336
        %v469 = vunpack.c.h.b16 %v336
        %v470 = vunpack.c.l.b16 %v337
        %v471 = vunpack.c.h.b16 %v337
        %v472 = vunpack.c.l.b16 %v338
        %v473 = vunpack.c.h.b16 %v338
        %v474 = vunpack.c.l.b16 %v339
        %v475 = vunpack.c.h.b16 %v339
        %v476 = vunpack.c.l.b16 %v340
        %v477 = vunpack.c.h.b16 %v340
        %v478 = vunpack.c.l.b16 %v341
        %v479 = vunpack.c.h.b16 %v341
        %v480 = vunpack.c.l.b16 %v342
        %v481 = vunpack.c.h.b16 %v342
        %v482 = vunpack.c.l.b16 %v343
        %v483 = vunpack.c.h.b16 %v343
        %v484 = vunpack.c.l.b16 %v344
        %v485 = vunpack.c.h.b16 %v344
        %v486 = vunpack.c.l.b16 %v345
        %v487 = vunpack.c.h.b16 %v345
        %v488 = vunpack.c.l.b16 %v346
        %v489 = vunpack.c.h.b16 %v346
        %v490 = vunpack.c.l.b16 %v347
        %v491 = vunpack.c.h.b16 %v347
        %v492 = vunpack.c.l.b16 %v348
        %v493 = vunpack.c.h.b16 %v348
        %v494 = vunpack.c.l.b16 %v349
        %v495 = vunpack.c.h.b16 %v349
        %v496 = vunpack.c.l.b16 %v350
        %v497 = vunpack.c.h.b16 %v350
        %v498 = vunpack.c.l.b16 %v351
        %v499 = vunpack.c.h.b16 %v351
        %v500 = vunpack.c.l.b16 %v352
        %v501 = vunpack.c.h.b16 %v352
        %v502 = vunpack.c.l.b16 %v353
        %v503 = vunpack.c.h.b16 %v353
        %v504 = vunpack.c.l.b16 %v354
        %v505 = vunpack.c.h.b16 %v354
        %v506 = vunpack.c.l.b16 %v355
        %v507 = vunpack.c.h.b16 %v355
        %v508 = vunpack.c.l.b16 %v356
        %v509 = vunpack.c.h.b16 %v356
        %v510 = vunpack.c.l.b16 %v357
        %v511 = vunpack.c.h.b16 %v357
        %v512 = vunpack.c.l.b16 %v358
        %v513 = vunpack.c.h.b16 %v358
        %v514 = vunpack.c.l.b16 %v359
        %v515 = vunpack.c.h.b16 %v359
        %v516 = vunpack.c.l.b16 %v360
        %v517 = vunpack.c.h.b16 %v360
        %v518 = vunpack.c.l.b16 %v361
        %v519 = vunpack.c.h.b16 %v361
        %v520 = vunpack.c.l.b16 %v362
        %v521 = vunpack.c.h.b16 %v362
        %v522 = vunpack.c.l.b16 %v363
        %v523 = vunpack.c.h.b16 %v363
        %v524 = vpack.c.b16 %v462, %v460
        %v525 = vpack.c.b16 %v463, %v461
        %v526 = vpack.c.b16 %v466, %v464
        %v527 = vpack.c.b16 %v467, %v465
        %v528 = vpack.c.b16 %v470, %v468
        %v529 = vpack.c.b16 %v471, %v469
        %v530 = vpack.c.b16 %v474, %v472
        %v531 = vpack.c.b16 %v475, %v473
        %v532 = vpack.c.b16 %v478, %v476
        %v533 = vpack.c.b16 %v479, %v477
        %v534 = vpack.c.b16 %v482, %v480
        %v535 = vpack.c.b16 %v483, %v481
        %v536 = vpack.c.b16 %v486, %v484
        %v537 = vpack.c.b16 %v487, %v485
        %v538 = vpack.c.b16 %v490, %v488
        %v539 = vpack.c.b16 %v491, %v489
        %v540 = vpack.c.b16 %v494, %v492
        %v541 = vpack.c.b16 %v495, %v493
        %v542 = vpack.c.b16 %v498, %v496
        %v543 = vpack.c.b16 %v499, %v497
        %v544 = vpack.c.b16 %v502, %v500
        %v545 = vpack.c.b16 %v503, %v501
        %v546 = vpack.c.b16 %v506, %v504
        %v547 = vpack.c.b16 %v507, %v505
        %v548 = vpack.c.b16 %v510, %v508
        %v549 = vpack.c.b16 %v511, %v509
        %v550 = vpack.c.b16 %v514, %v512
        %v551 = vpack.c.b16 %v515, %v513
        %v552 = vpack.c.b16 %v518, %v516
        %v553 = vpack.c.b16 %v519, %v517
        %v554 = vpack.c.b16 %v522, %v520
        %v555 = vpack.c.b16 %v523, %v521
        %v620 = vunpack.c.l.b16 %v396
        %v621 = vunpack.c.l.b16 %v397
        %v622 = vunpack.c.l.b16 %v398
        %v623 = vunpack.c.l.b16 %v399
        %v624 = vunpack.c.l.b16 %v400
        %v625 = vunpack.c.l.b16 %v401
        %v626 = vunpack.c.l.b16 %v402
        %v627 = vunpack.c.l.b16 %v403
        %v628 = vunpack.c.l.b16 %v404
        %v629 = vunpack.c.l.b16 %v405
        %v630 = vunpack.c.l.b16 %v406
        %v631 = vunpack.c.l.b16 %v407
        %v632 = vunpack.c.l.b16 %v408
        %v633 = vunpack.c.l.b16 %v409
        %v634 = vunpack.c.l.b16 %v410
        %v635 = vunpack.c.l.b16 %v411
        %v636 = vunpack.c.l.b16 %v412
        %v637 = vunpack.c.l.b16 %v413
        %v638 = vunpack.c.l.b16 %v414
        %v639 = vunpack.c.l.b16 %v415
        %v640 = vunpack.c.l.b16 %v416
        %v641 = vunpack.c.l.b16 %v417
        %v642 = vunpack.c.l.b16 %v418
        %v643 = vunpack.c.l.b16 %v419
        %v644 = vunpack.c.l.b16 %v420
        %v645 = vunpack.c.l.b16 %v421
        %v646 = vunpack.c.l.b16 %v422
        %v647 = vunpack.c.l.b16 %v423
        %v648 = vunpack.c.l.b16 %v424
        %v649 = vunpack.c.l.b16 %v425
        %v650 = vunpack.c.l.b16 %v426
        %v651 = vunpack.c.l.b16 %v427
        %v652 = vpack.c.b16 %v621, %v620
        %v653 = vpack.c.b16 %v623, %v622
        %v654 = vpack.c.b16 %v625, %v624
        %v655 = vpack.c.b16 %v627, %v626
        %v656 = vpack.c.b16 %v629, %v628
        %v657 = vpack.c.b16 %v631, %v630
        %v658 = vpack.c.b16 %v633, %v632
        %v659 = vpack.c.b16 %v635, %v634
        %v660 = vpack.c.b16 %v637, %v636
        %v661 = vpack.c.b16 %v639, %v638
        %v662 = vpack.c.b16 %v641, %v640
        %v663 = vpack.c.b16 %v643, %v642
        %v664 = vpack.c.b16 %v645, %v644
        %v665 = vpack.c.b16 %v647, %v646
        %v666 = vpack.c.b16 %v649, %v648
        %v667 = vpack.c.b16 %v651, %v650
        %684 = vmatpush.bf16.msra.mxu0 %v659
        %685 = vmatpush.bf16.msra.mxu0 %v658
        %686 = vmatpush.bf16.msra.mxu0 %v657
        %687 = vmatpush.bf16.msra.mxu0 %v656
        %688 = vmatpush.bf16.msra.mxu0 %v655
        %689 = vmatpush.bf16.msra.mxu0 %v654
        %690 = vmatpush.bf16.msra.mxu0 %v653
        %691 = vmatpush.bf16.msra.mxu0 %v652
        %692 = vmatmul.bf16.gmra.mxu0 %v524
        %v693 = vpop.f32.mrf.mxu0
        %v694 = vadd.f32 0.0, %v693
        %v695 = vpop.f32.mrf.mxu0
        %v696 = vadd.f32 0.0, %v695
        %697 = vmatmul.bf16.gmra.mxu0 %v526
        %v698 = vpop.f32.mrf.mxu0
        %v699 = vadd.f32 0.0, %v698
        %v700 = vpop.f32.mrf.mxu0
        %v701 = vadd.f32 0.0, %v700
        %702 = vmatmul.bf16.gmra.mxu0 %v528
        %v703 = vpop.f32.mrf.mxu0
        %v704 = vadd.f32 0.0, %v703
        %v705 = vpop.f32.mrf.mxu0
        %v706 = vadd.f32 0.0, %v705
        %707 = vmatmul.bf16.gmra.mxu0 %v530
        %v708 = vpop.f32.mrf.mxu0
        %v709 = vadd.f32 0.0, %v708
        %v710 = vpop.f32.mrf.mxu0
        %v711 = vadd.f32 0.0, %v710
        %712 = vmatmul.bf16.gmra.mxu0 %v532
        %v713 = vpop.f32.mrf.mxu0
        %v714 = vadd.f32 0.0, %v713
        %v715 = vpop.f32.mrf.mxu0
        %v716 = vadd.f32 0.0, %v715
        %717 = vmatmul.bf16.gmra.mxu0 %v534
        %v718 = vpop.f32.mrf.mxu0
        %v719 = vadd.f32 0.0, %v718
        %v720 = vpop.f32.mrf.mxu0
        %v721 = vadd.f32 0.0, %v720
        %722 = vmatmul.bf16.gmra.mxu0 %v536
        %v723 = vpop.f32.mrf.mxu0
        %v724 = vadd.f32 0.0, %v723
        %v725 = vpop.f32.mrf.mxu0
        %v726 = vadd.f32 0.0, %v725
        %727 = vmatmul.bf16.gmra.mxu0 %v538
        %v728 = vpop.f32.mrf.mxu0
        %v729 = vadd.f32 0.0, %v728
        %v730 = vpop.f32.mrf.mxu0
        %v731 = vadd.f32 0.0, %v730
        %732 = vmatmul.bf16.gmra.mxu0 %v540
        %v733 = vpop.f32.mrf.mxu0
        %v734 = vadd.f32 0.0, %v733
        %v735 = vpop.f32.mrf.mxu0
        %v736 = vadd.f32 0.0, %v735
        %737 = vmatmul.bf16.gmra.mxu0 %v542
        %v738 = vpop.f32.mrf.mxu0
        %v739 = vadd.f32 0.0, %v738
        %v740 = vpop.f32.mrf.mxu0
        %v741 = vadd.f32 0.0, %v740
        %742 = vmatmul.bf16.gmra.mxu0 %v544
        %v743 = vpop.f32.mrf.mxu0
        %v744 = vadd.f32 0.0, %v743
        %v745 = vpop.f32.mrf.mxu0
        %v746 = vadd.f32 0.0, %v745
        %747 = vmatmul.bf16.gmra.mxu0 %v546
        %v748 = vpop.f32.mrf.mxu0
        %v749 = vadd.f32 0.0, %v748
        %v750 = vpop.f32.mrf.mxu0
        %v751 = vadd.f32 0.0, %v750
        %752 = vmatmul.bf16.gmra.mxu0 %v548
        %v753 = vpop.f32.mrf.mxu0
        %v754 = vadd.f32 0.0, %v753
        %v755 = vpop.f32.mrf.mxu0
        %v756 = vadd.f32 0.0, %v755
        %757 = vmatmul.bf16.gmra.mxu0 %v550
        %v758 = vpop.f32.mrf.mxu0
        %v759 = vadd.f32 0.0, %v758
        %v760 = vpop.f32.mrf.mxu0
        %v761 = vadd.f32 0.0, %v760
        %762 = vmatmul.bf16.gmra.mxu0 %v552
        %v763 = vpop.f32.mrf.mxu0
        %v764 = vadd.f32 0.0, %v763
        %v765 = vpop.f32.mrf.mxu0
        %v766 = vadd.f32 0.0, %v765
        %767 = vmatmul.bf16.gmra.mxu0 %v554
        %v768 = vpop.f32.mrf.mxu0
        %v769 = vadd.f32 0.0, %v768
        %v770 = vpop.f32.mrf.mxu0
        %v771 = vadd.f32 0.0, %v770
        %772 = vdwg.mxu0
        %773 = vmatpush.bf16.msra.mxu0 %v667
        %774 = vmatpush.bf16.msra.mxu0 %v666
        %775 = vmatpush.bf16.msra.mxu0 %v665
        %776 = vmatpush.bf16.msra.mxu0 %v664
        %777 = vmatpush.bf16.msra.mxu0 %v663
        %778 = vmatpush.bf16.msra.mxu0 %v662
        %779 = vmatpush.bf16.msra.mxu0 %v661
        %780 = vmatpush.bf16.msra.mxu0 %v660
        %781 = vmatmul.bf16.gmra.mxu0 %v525
        %v782 = vpop.f32.mrf.mxu0
        %v783 = vadd.f32 %v694, %v782
        %v784 = vpop.f32.mrf.mxu0
        %v785 = vadd.f32 %v696, %v784
        %786 = vmatmul.bf16.gmra.mxu0 %v527
        %v787 = vpop.f32.mrf.mxu0
        %v788 = vadd.f32 %v699, %v787
        %v789 = vpop.f32.mrf.mxu0
        %v790 = vadd.f32 %v701, %v789
        %791 = vmatmul.bf16.gmra.mxu0 %v529
        %v792 = vpop.f32.mrf.mxu0
        %v793 = vadd.f32 %v704, %v792
        %v794 = vpop.f32.mrf.mxu0
        %v795 = vadd.f32 %v706, %v794
        %796 = vmatmul.bf16.gmra.mxu0 %v531
        %v797 = vpop.f32.mrf.mxu0
        %v798 = vadd.f32 %v709, %v797
        %v799 = vpop.f32.mrf.mxu0
        %v800 = vadd.f32 %v711, %v799
        %801 = vmatmul.bf16.gmra.mxu0 %v533
        %v802 = vpop.f32.mrf.mxu0
        %v803 = vadd.f32 %v714, %v802
        %v804 = vpop.f32.mrf.mxu0
        %v805 = vadd.f32 %v716, %v804
        %806 = vmatmul.bf16.gmra.mxu0 %v535
        %v807 = vpop.f32.mrf.mxu0
        %v808 = vadd.f32 %v719, %v807
        %v809 = vpop.f32.mrf.mxu0
        %v810 = vadd.f32 %v721, %v809
        %811 = vmatmul.bf16.gmra.mxu0 %v537
        %v812 = vpop.f32.mrf.mxu0
        %v813 = vadd.f32 %v724, %v812
        %v814 = vpop.f32.mrf.mxu0
        %v815 = vadd.f32 %v726, %v814
        %816 = vmatmul.bf16.gmra.mxu0 %v539
        %v817 = vpop.f32.mrf.mxu0
        %v818 = vadd.f32 %v729, %v817
        %v819 = vpop.f32.mrf.mxu0
        %v820 = vadd.f32 %v731, %v819
        %821 = vmatmul.bf16.gmra.mxu0 %v541
        %v822 = vpop.f32.mrf.mxu0
        %v823 = vadd.f32 %v734, %v822
        %v824 = vpop.f32.mrf.mxu0
        %v825 = vadd.f32 %v736, %v824
        %826 = vmatmul.bf16.gmra.mxu0 %v543
        %v827 = vpop.f32.mrf.mxu0
        %v828 = vadd.f32 %v739, %v827
        %v829 = vpop.f32.mrf.mxu0
        %v830 = vadd.f32 %v741, %v829
        %831 = vmatmul.bf16.gmra.mxu0 %v545
        %v832 = vpop.f32.mrf.mxu0
        %v833 = vadd.f32 %v744, %v832
        %v834 = vpop.f32.mrf.mxu0
        %v835 = vadd.f32 %v746, %v834
        %836 = vmatmul.bf16.gmra.mxu0 %v547
        %v837 = vpop.f32.mrf.mxu0
        %v838 = vadd.f32 %v749, %v837
        %v839 = vpop.f32.mrf.mxu0
        %v840 = vadd.f32 %v751, %v839
        %841 = vmatmul.bf16.gmra.mxu0 %v549
        %v842 = vpop.f32.mrf.mxu0
        %v843 = vadd.f32 %v754, %v842
        %v844 = vpop.f32.mrf.mxu0
        %v845 = vadd.f32 %v756, %v844
        %846 = vmatmul.bf16.gmra.mxu0 %v551
        %v847 = vpop.f32.mrf.mxu0
        %v848 = vadd.f32 %v759, %v847
        %v849 = vpop.f32.mrf.mxu0
        %v850 = vadd.f32 %v761, %v849
        %851 = vmatmul.bf16.gmra.mxu0 %v553
        %v852 = vpop.f32.mrf.mxu0
        %v853 = vadd.f32 %v764, %v852
        %v854 = vpop.f32.mrf.mxu0
        %v855 = vadd.f32 %v766, %v854
        %856 = vmatmul.bf16.gmra.mxu0 %v555
        %v857 = vpop.f32.mrf.mxu0
        %v858 = vadd.f32 %v769, %v857
        %v859 = vpop.f32.mrf.mxu0
        %v860 = vadd.f32 %v771, %v859
        %861 = vdwg.mxu0
        %v862 = vadd.f32 %v364, %v783
        %v863 = vadd.f32 %v365, %v785
        %v864 = vadd.f32 %v366, %v788
        %v865 = vadd.f32 %v367, %v790
        %v866 = vadd.f32 %v368, %v793
        %v867 = vadd.f32 %v369, %v795
        %v868 = vadd.f32 %v370, %v798
        %v869 = vadd.f32 %v371, %v800
        %v870 = vadd.f32 %v372, %v803
        %v871 = vadd.f32 %v373, %v805
        %v872 = vadd.f32 %v374, %v808
        %v873 = vadd.f32 %v375, %v810
        %v874 = vadd.f32 %v376, %v813
        %v875 = vadd.f32 %v377, %v815
        %v876 = vadd.f32 %v378, %v818
        %v877 = vadd.f32 %v379, %v820
        %v878 = vadd.f32 %v380, %v823
        %v879 = vadd.f32 %v381, %v825
        %v880 = vadd.f32 %v382, %v828
        %v881 = vadd.f32 %v383, %v830
        %v882 = vadd.f32 %v384, %v833
        %v883 = vadd.f32 %v385, %v835
        %v884 = vadd.f32 %v386, %v838
        %v885 = vadd.f32 %v387, %v840
        %v886 = vadd.f32 %v388, %v843
        %v887 = vadd.f32 %v389, %v845
        %v888 = vadd.f32 %v390, %v848
        %v889 = vadd.f32 %v391, %v850
        %v890 = vadd.f32 %v392, %v853
        %v891 = vadd.f32 %v393, %v855
        %v892 = vadd.f32 %v394, %v858
        %v893 = vadd.f32 %v395, %v860
        %894 = vst [vmem:[#allocation2] sm:$0xff] %v862
        %895 = vst [vmem:[#allocation2 + $0x8] sm:$0xff] %v863
        %896 = vst [vmem:[#allocation2 + $0x10] sm:$0xff] %v864
        %897 = vst [vmem:[#allocation2 + $0x18] sm:$0xff] %v865
        %898 = vst [vmem:[#allocation2 + $0x20] sm:$0xff] %v866
        %899 = vst [vmem:[#allocation2 + $0x28] sm:$0xff] %v867
        %900 = vst [vmem:[#allocation2 + $0x30] sm:$0xff] %v868
        %901 = vst [vmem:[#allocation2 + $0x38] sm:$0xff] %v869
        %902 = vst [vmem:[#allocation2 + $0x40] sm:$0xff] %v870
        %903 = vst [vmem:[#allocation2 + $0x48] sm:$0xff] %v871
        %904 = vst [vmem:[#allocation2 + $0x50] sm:$0xff] %v872
        %905 = vst [vmem:[#allocation2 + $0x58] sm:$0xff] %v873
        %906 = vst [vmem:[#allocation2 + $0x60] sm:$0xff] %v874
        %907 = vst [vmem:[#allocation2 + $0x68] sm:$0xff] %v875
        %908 = vst [vmem:[#allocation2 + $0x70] sm:$0xff] %v876
        %909 = vst [vmem:[#allocation2 + $0x78] sm:$0xff] %v877
        %910 = vst [vmem:[#allocation2 + $0x80] sm:$0xff] %v878
        %911 = vst [vmem:[#allocation2 + $0x88] sm:$0xff] %v879
        %912 = vst [vmem:[#allocation2 + $0x90] sm:$0xff] %v880
        %913 = vst [vmem:[#allocation2 + $0x98] sm:$0xff] %v881
        %914 = vst [vmem:[#allocation2 + $0xa0] sm:$0xff] %v882
        %915 = vst [vmem:[#allocation2 + $0xa8] sm:$0xff] %v883
        %916 = vst [vmem:[#allocation2 + $0xb0] sm:$0xff] %v884
        %917 = vst [vmem:[#allocation2 + $0xb8] sm:$0xff] %v885
        %918 = vst [vmem:[#allocation2 + $0xc0] sm:$0xff] %v886
        %919 = vst [vmem:[#allocation2 + $0xc8] sm:$0xff] %v887
        %920 = vst [vmem:[#allocation2 + $0xd0] sm:$0xff] %v888
        %921 = vst [vmem:[#allocation2 + $0xd8] sm:$0xff] %v889
        %922 = vst [vmem:[#allocation2 + $0xe0] sm:$0xff] %v890
        %923 = vst [vmem:[#allocation2 + $0xe8] sm:$0xff] %v891
        %924 = vst [vmem:[#allocation2 + $0xf0] sm:$0xff] %v892
        %925 = vst [vmem:[#allocation2 + $0xf8] sm:$0xff] %v893
        // Predicated region
        $region41: #{tpu_custom_call.1} parent=27 // pred_check
          %p926 = pneg %p296
        $region42: #{tpu_custom_call.1} parent=27 // pred_check_branch
          %928 = sbr.rel (%p926) target = $region44
        $region43: #{tpu_custom_call.1} parent=27 // pred_region
          %v929 = vld [vmem:[#allocation2] sm:$0xff]
          %v930 = vld [vmem:[#allocation2 + $0x8] sm:$0xff]
          %v931 = vld [vmem:[#allocation2 + $0x10] sm:$0xff]
          %v932 = vld [vmem:[#allocation2 + $0x18] sm:$0xff]
          %v933 = vld [vmem:[#allocation2 + $0x20] sm:$0xff]
          %v934 = vld [vmem:[#allocation2 + $0x28] sm:$0xff]
          %v935 = vld [vmem:[#allocation2 + $0x30] sm:$0xff]
          %v936 = vld [vmem:[#allocation2 + $0x38] sm:$0xff]
          %v937 = vld [vmem:[#allocation2 + $0x40] sm:$0xff]
          %v938 = vld [vmem:[#allocation2 + $0x48] sm:$0xff]
          %v939 = vld [vmem:[#allocation2 + $0x50] sm:$0xff]
          %v940 = vld [vmem:[#allocation2 + $0x58] sm:$0xff]
          %v941 = vld [vmem:[#allocation2 + $0x60] sm:$0xff]
          %v942 = vld [vmem:[#allocation2 + $0x68] sm:$0xff]
          %v943 = vld [vmem:[#allocation2 + $0x70] sm:$0xff]
          %v944 = vld [vmem:[#allocation2 + $0x78] sm:$0xff]
          %v945 = vld [vmem:[#allocation2 + $0x80] sm:$0xff]
          %v946 = vld [vmem:[#allocation2 + $0x88] sm:$0xff]
          %v947 = vld [vmem:[#allocation2 + $0x90] sm:$0xff]
          %v948 = vld [vmem:[#allocation2 + $0x98] sm:$0xff]
          %v949 = vld [vmem:[#allocation2 + $0xa0] sm:$0xff]
          %v950 = vld [vmem:[#allocation2 + $0xa8] sm:$0xff]
          %v951 = vld [vmem:[#allocation2 + $0xb0] sm:$0xff]
          %v952 = vld [vmem:[#allocation2 + $0xb8] sm:$0xff]
          %v953 = vld [vmem:[#allocation2 + $0xc0] sm:$0xff]
          %v954 = vld [vmem:[#allocation2 + $0xc8] sm:$0xff]
          %v955 = vld [vmem:[#allocation2 + $0xd0] sm:$0xff]
          %v956 = vld [vmem:[#allocation2 + $0xd8] sm:$0xff]
          %v957 = vld [vmem:[#allocation2 + $0xe0] sm:$0xff]
          %v958 = vld [vmem:[#allocation2 + $0xe8] sm:$0xff]
          %v959 = vld [vmem:[#allocation2 + $0xf0] sm:$0xff]
          %v960 = vld [vmem:[#allocation2 + $0xf8] sm:$0xff]
          %v961 = vpack.c.bf16 %v929, %v929
          %v962 = vpack.c.bf16 %v930, %v930
          %v963 = vpack.c.bf16 %v931, %v931
          %v964 = vpack.c.bf16 %v932, %v932
          %v965 = vpack.c.bf16 %v933, %v933
          %v966 = vpack.c.bf16 %v934, %v934
          %v967 = vpack.c.bf16 %v935, %v935
          %v968 = vpack.c.bf16 %v936, %v936
          %v969 = vpack.c.bf16 %v937, %v937
          %v970 = vpack.c.bf16 %v938, %v938
          %v971 = vpack.c.bf16 %v939, %v939
          %v972 = vpack.c.bf16 %v940, %v940
          %v973 = vpack.c.bf16 %v941, %v941
          %v974 = vpack.c.bf16 %v942, %v942
          %v975 = vpack.c.bf16 %v943, %v943
          %v976 = vpack.c.bf16 %v944, %v944
          %v977 = vpack.c.bf16 %v945, %v945
          %v978 = vpack.c.bf16 %v946, %v946
          %v979 = vpack.c.bf16 %v947, %v947
          %v980 = vpack.c.bf16 %v948, %v948
          %v981 = vpack.c.bf16 %v949, %v949
          %v982 = vpack.c.bf16 %v950, %v950
          %v983 = vpack.c.bf16 %v951, %v951
          %v984 = vpack.c.bf16 %v952, %v952
          %v985 = vpack.c.bf16 %v953, %v953
          %v986 = vpack.c.bf16 %v954, %v954
          %v987 = vpack.c.bf16 %v955, %v955
          %v988 = vpack.c.bf16 %v956, %v956
          %v989 = vpack.c.bf16 %v957, %v957
          %v990 = vpack.c.bf16 %v958, %v958
          %v991 = vpack.c.bf16 %v959, %v959
          %v992 = vpack.c.bf16 %v960, %v960
          %993 = vst [vmem:[%s279] sm:$0xf] %v961
          %994 = vst [vmem:[%s279 + $0x4] sm:$0xf] %v962
          %995 = vst [vmem:[%s279 + $0x8] sm:$0xf] %v963
          %996 = vst [vmem:[%s279 + $0xc] sm:$0xf] %v964
          %997 = vst [vmem:[%s279 + $0x10] sm:$0xf] %v965
          %998 = vst [vmem:[%s279 + $0x14] sm:$0xf] %v966
          %999 = vst [vmem:[%s279 + $0x18] sm:$0xf] %v967
          %1000 = vst [vmem:[%s279 + $0x1c] sm:$0xf] %v968
          %1001 = vst [vmem:[%s279 + $0x20] sm:$0xf] %v969
          %1002 = vst [vmem:[%s279 + $0x24] sm:$0xf] %v970
          %1003 = vst [vmem:[%s279 + $0x28] sm:$0xf] %v971
          %1004 = vst [vmem:[%s279 + $0x2c] sm:$0xf] %v972
          %1005 = vst [vmem:[%s279 + $0x30] sm:$0xf] %v973
          %1006 = vst [vmem:[%s279 + $0x34] sm:$0xf] %v974
          %1007 = vst [vmem:[%s279 + $0x38] sm:$0xf] %v975
          %1008 = vst [vmem:[%s279 + $0x3c] sm:$0xf] %v976
          %1009 = vst [vmem:[%s279 + $0x40] sm:$0xf] %v977
          %1010 = vst [vmem:[%s279 + $0x44] sm:$0xf] %v978
          %1011 = vst [vmem:[%s279 + $0x48] sm:$0xf] %v979
          %1012 = vst [vmem:[%s279 + $0x4c] sm:$0xf] %v980
          %1013 = vst [vmem:[%s279 + $0x50] sm:$0xf] %v981
          %1014 = vst [vmem:[%s279 + $0x54] sm:$0xf] %v982
          %1015 = vst [vmem:[%s279 + $0x58] sm:$0xf] %v983
          %1016 = vst [vmem:[%s279 + $0x5c] sm:$0xf] %v984
          %1017 = vst [vmem:[%s279 + $0x60] sm:$0xf] %v985
          %1018 = vst [vmem:[%s279 + $0x64] sm:$0xf] %v986
          %1019 = vst [vmem:[%s279 + $0x68] sm:$0xf] %v987
          %1020 = vst [vmem:[%s279 + $0x6c] sm:$0xf] %v988
          %1021 = vst [vmem:[%s279 + $0x70] sm:$0xf] %v989
          %1022 = vst [vmem:[%s279 + $0x74] sm:$0xf] %v990
          %1023 = vst [vmem:[%s279 + $0x78] sm:$0xf] %v991
          %1024 = vst [vmem:[%s279 + $0x7c] sm:$0xf] %v992
          %v1025 = vadd.f32 %v929, %v930
          %v1026 = vadd.f32 %v1025, %v931
          %v1027 = vadd.f32 %v1026, %v932
          %v1028 = vadd.f32 %v1027, %v933
          %v1029 = vadd.f32 %v1028, %v934
          %v1030 = vadd.f32 %v1029, %v935
          %v1031 = vadd.f32 %v1030, %v936
          %v1032 = vadd.f32 %v1031, %v937
          %v1033 = vadd.f32 %v1032, %v938
          %v1034 = vadd.f32 %v1033, %v939
          %v1035 = vadd.f32 %v1034, %v940
          %v1036 = vadd.f32 %v1035, %v941
          %v1037 = vadd.f32 %v1036, %v942
          %v1038 = vadd.f32 %v1037, %v943
          %v1039 = vadd.f32 %v1038, %v944
          %v1040 = vadd.f32 %v1039, %v945
          %v1041 = vadd.f32 %v1040, %v946
          %v1042 = vadd.f32 %v1041, %v947
          %v1043 = vadd.f32 %v1042, %v948
          %v1044 = vadd.f32 %v1043, %v949
          %v1045 = vadd.f32 %v1044, %v950
          %v1046 = vadd.f32 %v1045, %v951
          %v1047 = vadd.f32 %v1046, %v952
          %v1048 = vadd.f32 %v1047, %v953
          %v1049 = vadd.f32 %v1048, %v954
          %v1050 = vadd.f32 %v1049, %v955
          %v1051 = vadd.f32 %v1050, %v956
          %v1052 = vadd.f32 %v1051, %v957
          %v1053 = vadd.f32 %v1052, %v958
          %v1054 = vadd.f32 %v1053, %v959
          %v1055 = vadd.f32 %v1054, %v960
          %v1056 = vrot.slane %v1055, 4
          %v1057 = vadd.f32 %v1055, %v1056
          %v1058 = vrot.slane %v1057, 2
          %v1059 = vadd.f32 %v1057, %v1058
          %v1060 = vrot.slane %v1059, 1
          %v1061 = vadd.f32 %v1059, %v1060
          %1062 = vst [vmem:[%s285] sm:$0x1] %v1061
          %v1063 = vmul.f32 %v929, %v929
          %v1064 = vmul.f32 %v930, %v930
          %v1065 = vmul.f32 %v931, %v931
          %v1066 = vmul.f32 %v932, %v932
          %v1067 = vmul.f32 %v933, %v933
          %v1068 = vmul.f32 %v934, %v934
          %v1069 = vmul.f32 %v935, %v935
          %v1070 = vmul.f32 %v936, %v936
          %v1071 = vmul.f32 %v937, %v937
          %v1072 = vmul.f32 %v938, %v938
          %v1073 = vmul.f32 %v939, %v939
          %v1074 = vmul.f32 %v940, %v940
          %v1075 = vmul.f32 %v941, %v941
          %v1076 = vmul.f32 %v942, %v942
          %v1077 = vmul.f32 %v943, %v943
          %v1078 = vmul.f32 %v944, %v944
          %v1079 = vmul.f32 %v945, %v945
          %v1080 = vmul.f32 %v946, %v946
          %v1081 = vmul.f32 %v947, %v947
          %v1082 = vmul.f32 %v948, %v948
          %v1083 = vmul.f32 %v949, %v949
          %v1084 = vmul.f32 %v950, %v950
          %v1085 = vmul.f32 %v951, %v951
          %v1086 = vmul.f32 %v952, %v952
          %v1087 = vmul.f32 %v953, %v953
          %v1088 = vmul.f32 %v954, %v954
          %v1089 = vmul.f32 %v955, %v955
          %v1090 = vmul.f32 %v956, %v956
          %v1091 = vmul.f32 %v957, %v957
          %v1092 = vmul.f32 %v958, %v958
          %v1093 = vmul.f32 %v959, %v959
          %v1094 = vmul.f32 %v960, %v960
          %v1095 = vadd.f32 %v1063, %v1064
          %v1096 = vadd.f32 %v1095, %v1065
          %v1097 = vadd.f32 %v1096, %v1066
          %v1098 = vadd.f32 %v1097, %v1067
          %v1099 = vadd.f32 %v1098, %v1068
          %v1100 = vadd.f32 %v1099, %v1069
          %v1101 = vadd.f32 %v1100, %v1070
          %v1102 = vadd.f32 %v1101, %v1071
          %v1103 = vadd.f32 %v1102, %v1072
          %v1104 = vadd.f32 %v1103, %v1073
          %v1105 = vadd.f32 %v1104, %v1074
          %v1106 = vadd.f32 %v1105, %v1075
          %v1107 = vadd.f32 %v1106, %v1076
          %v1108 = vadd.f32 %v1107, %v1077
          %v1109 = vadd.f32 %v1108, %v1078
          %v1110 = vadd.f32 %v1109, %v1079
          %v1111 = vadd.f32 %v1110, %v1080
          %v1112 = vadd.f32 %v1111, %v1081
          %v1113 = vadd.f32 %v1112, %v1082
          %v1114 = vadd.f32 %v1113, %v1083
          %v1115 = vadd.f32 %v1114, %v1084
          %v1116 = vadd.f32 %v1115, %v1085
          %v1117 = vadd.f32 %v1116, %v1086
          %v1118 = vadd.f32 %v1117, %v1087
          %v1119 = vadd.f32 %v1118, %v1088
          %v1120 = vadd.f32 %v1119, %v1089
          %v1121 = vadd.f32 %v1120, %v1090
          %v1122 = vadd.f32 %v1121, %v1091
          %v1123 = vadd.f32 %v1122, %v1092
          %v1124 = vadd.f32 %v1123, %v1093
          %v1125 = vadd.f32 %v1124, %v1094
          %v1126 = vrot.slane %v1125, 4
          %v1127 = vadd.f32 %v1125, %v1126
          %v1128 = vrot.slane %v1127, 2
          %v1129 = vadd.f32 %v1127, %v1128
          %v1130 = vrot.slane %v1129, 1
          %v1131 = vadd.f32 %v1129, %v1130
          %1132 = vst [vmem:[%s291] sm:$0x1] %v1131
        $region44: #{tpu_custom_call.1} parent=27 // pred_fallthru
          _
        %s1133 = sand.u32 %s111, 1
        %s1134 = scalar_lea.sflag [#allocation5], %s1133
        %s1135 = sand.u32 %s111, 1
        %s1136 = smul.addr %s1135, 128
        %s1137 = scalar_lea.vmem [#allocation8], %s1136
        %s1138 = sand.u32 %s26, 1
        %s1139 = scalar_lea.sflag [#allocation10], %s1138
        %s1140 = sand.u32 %s139, 1
        %s1141 = scalar_lea.vmem [#allocation9], %s1140
        %s1142 = sand.u32 %s26, 1
        %s1143 = scalar_lea.sflag [#allocation10], %s1142
        %s1144 = sand.u32 %s167, 1
        %s1145 = scalar_lea.vmem [#allocation11], %s1144
        // Predicated region
        $region45: #{tpu_custom_call.1} parent=27 // pred_check
          %p1146 = pneg %p121
        $region46: #{tpu_custom_call.1} parent=27 // pred_check_branch
          %1148 = sbr.rel (%p1146) target = $region48
        $region47: #{tpu_custom_call.1} parent=27 // pred_region
          %s1149 = smul.u32 32, %s31
          %1151 = vsyncadd %s1134, 0
          %s1152 = sadd.s32 %s32, %s1149
          %s1153 = smul.addr %s1152, 4
          %s1154 = scalar_lea.hbm %s2, %s1153
          %s1155 = sshll.u32 %s1137, 4
          %s1156 = int_to_ptr.vmem [resolvable:$true] %s1155
          %s1157 = sshll.u32 %s1154, 4
          %s1158 = int_to_ptr.hbm [resolvable:$true] %s1157
          %1163 = dma.vmem_to_hbm [thread:$0]  %s1156, 2048, %s1158, %s1134, 64, 64, 4
        $region48: #{tpu_custom_call.1} parent=27 // pred_fallthru
          _
        // Predicated region
        $region49: #{tpu_custom_call.1} parent=27 // pred_check
          %p1164 = pneg %p149
        $region50: #{tpu_custom_call.1} parent=27 // pred_check_branch
          %1166 = sbr.rel (%p1164) target = $region52
        $region51: #{tpu_custom_call.1} parent=27 // pred_region
          %1168 = vsyncadd %s1139, 0
          %s1169 = sadd.s32 %s32, %s31
          %s1170 = scalar_lea.hbm %s3, %s1169
          %s1172 = sshll.u32 %s1141, 4
          %s1173 = int_to_ptr.vmem [resolvable:$true] %s1172
          %s1174 = sshll.u32 %s1170, 4
          %s1175 = int_to_ptr.hbm [resolvable:$true] %s1174
          %1177 = dma.vmem_to_hbm [thread:$0]  %s1173, 16, %s1175, %s1139
        $region52: #{tpu_custom_call.1} parent=27 // pred_fallthru
          _
        // Predicated region
        $region53: #{tpu_custom_call.1} parent=27 // pred_check
          %p1178 = pneg %p177
        $region54: #{tpu_custom_call.1} parent=27 // pred_check_branch
          %1180 = sbr.rel (%p1178) target = $region56
        $region55: #{tpu_custom_call.1} parent=27 // pred_region
          %1182 = vsyncadd %s1143, 0
          %s1183 = sadd.s32 %s32, %s31
          %s1184 = scalar_lea.hbm %s4, %s1183
          %s1186 = sshll.u32 %s1145, 4
          %s1187 = int_to_ptr.vmem [resolvable:$true] %s1186
          %s1188 = sshll.u32 %s1184, 4
          %s1189 = int_to_ptr.hbm [resolvable:$true] %s1188
          %1191 = dma.vmem_to_hbm [thread:$0]  %s1187, 16, %s1189, %s1143
        $region56: #{tpu_custom_call.1} parent=27 // pred_fallthru
          _
      $region28: #{tpu_custom_call.1} parent=5 // pred_fallthru
        _
      %p1192 = scmp.le.s32.totalorder 2, %s21
      // Predicated region
      $region57: #{tpu_custom_call.1} parent=5 // pred_check
        %p1193 = pneg %p1192
      $region58: #{tpu_custom_call.1} parent=5 // pred_check_branch
        %1195 = sbr.rel (%p1193) target = $region60
      $region59: #{tpu_custom_call.1} parent=5 // pred_region
        %s1196 = ssub.s32 %s21, 2
        // Predicated region
        $region61: #{tpu_custom_call.1} parent=59 // pred_check
          %p1197 = pneg %p127
        $region62: #{tpu_custom_call.1} parent=59 // pred_check_branch
          %1199 = sbr.rel (%p1197) target = $region64
        $region63: #{tpu_custom_call.1} parent=59 // pred_region
          %s1200 = sand.u32 %s112, 1
          %s1201 = scalar_lea.sflag [#allocation5], %s1200
          %s1202 = sand.u32 %s112, 1
          %s1203 = smul.addr %s1202, 128
          %s1204 = scalar_lea.vmem [#allocation8], %s1203
          %1206 = dma.done %s1201, 2048
        $region64: #{tpu_custom_call.1} parent=59 // pred_fallthru
          _
        // Predicated region
        $region65: #{tpu_custom_call.1} parent=59 // pred_check
          %p1207 = pneg %p155
        $region66: #{tpu_custom_call.1} parent=59 // pred_check_branch
          %1209 = sbr.rel (%p1207) target = $region68
        $region67: #{tpu_custom_call.1} parent=59 // pred_region
          %s1210 = sand.u32 %s27, 1
          %s1211 = scalar_lea.sflag [#allocation10], %s1210
          %s1212 = sand.u32 %s140, 1
          %s1213 = scalar_lea.vmem [#allocation9], %s1212
          %1215 = dma.done %s1211, 16
        $region68: #{tpu_custom_call.1} parent=59 // pred_fallthru
          _
        // Predicated region
        $region69: #{tpu_custom_call.1} parent=59 // pred_check
          %p1216 = pneg %p183
        $region70: #{tpu_custom_call.1} parent=59 // pred_check_branch
          %1218 = sbr.rel (%p1216) target = $region72
        $region71: #{tpu_custom_call.1} parent=59 // pred_region
          %s1219 = sand.u32 %s27, 1
          %s1220 = scalar_lea.sflag [#allocation10], %s1219
          %s1221 = sand.u32 %s168, 1
          %s1222 = scalar_lea.vmem [#allocation11], %s1221
          %1224 = dma.done %s1220, 16
        $region72: #{tpu_custom_call.1} parent=59 // pred_fallthru
          _
      $region60: #{tpu_custom_call.1} parent=5 // pred_fallthru
        _
    $region6: #{tpu_custom_call.1} parent=1 // loop_footer
      %s25 = sadd.s32 1, %s21
    $region7: #{tpu_custom_call.1} parent=1 // loop_footer_branch
      %20 = sbr.rel target = $region3
    $region8: #{tpu_custom_call.1} parent=1 // loop_exit
      _
    %1225 = vsyncpa [#allocation4], 1
    %s1226 = scalar_lea.sflag [#allocation4], 1
    %1227 = vsyncpa %s1226, 1
    %1228 = vsyncpa [#allocation7], 1
    %1229 = vsyncpa [#allocation5], 1
    %s1230 = scalar_lea.sflag [#allocation5], 1
    %1231 = vsyncpa %s1230, 1
    %1232 = vsyncpa [#allocation10], 1
    %s1233 = scalar_lea.sflag [#allocation10], 1
    %1234 = vsyncpa %s1233, 1

</llo_original>
